<compile_context>
chip_gen: v7x
topology: tpu7x:2x2x1
jax: 0.10.0
libtpu: 0.0.40
codegen_flags: <defaults>
</compile_context>

<pallas_src>
import jax
import jax.numpy as jnp
from jax import lax
from jax.experimental import pallas as pl
from jax.experimental.pallas import tpu as pltpu


def _round_up(x, m):
    return ((x + m - 1) // m) * m


def lstm_decoder_kernel(gx_ref, w_hh_ref, w_out_ref, b_out_ref, h0_ref, c0_ref,
                        scores_ref, h_out_ref, c_out_ref):
    """Single-invocation LSTM decoder.

    gx_ref     : (L*Bp, 4H)  precomputed x@W_ih + bias (time-major, batch-padded)
    w_hh_ref   : (H, 4H)     recurrent weights, gate order i,f,g,o
    w_out_ref  : (H, Vp)     vocab projection (Vp = V padded to 128 lanes)
    b_out_ref  : (1, Vp)
    h0/c0      : (Bp, H)     initial hidden / cell state
    scores_ref : (L*Bp, Vp)  flat, lane-dense output slab (written per step)
    h_out/c_out: (Bp, H)     final hidden / cell state (written once)
    """
    Bp, H = h0_ref.shape
    L = gx_ref.shape[0] // Bp
    Vp = w_out_ref.shape[1]

    # Hoisted loop invariants (single load / single broadcast).
    w_hh = w_hh_ref[...]                                          # (H, 4H)
    w_out = w_out_ref[...]                                        # (H, Vp)
    b_out = jnp.broadcast_to(b_out_ref[...], (Bp, Vp))            # hoisted broadcast

    # Sequential recurrence, fully unrolled (L static & small); h/c carried as
    # register values.  Only the unavoidable h @ W_hh matmul remains per step.
    # TODO(synk): hold W_hh stationary via pltpu.matmul_push_rhs/acc_lhs/pop to avoid
    # re-pushing the (H, 4H) block each step (kept as jnp.dot for lowering robustness).
    h = h0_ref[...]
    c = c0_ref[...]
    for t in range(L):                                            # static -> full unroll
        lo = t * Bp
        gates = gx_ref[lo:lo + Bp, :] + jnp.dot(
            h, w_hh, preferred_element_type=jnp.float32)          # (Bp, 4H) one vreg

        # Two full-vreg EUP passes instead of four quarter-vreg ones.
        sig = jax.nn.sigmoid(gates)
        tnh = jnp.tanh(gates)
        i_g = sig[:, 0 * H:1 * H]
        f_g = sig[:, 1 * H:2 * H]
        g_g = tnh[:, 2 * H:3 * H]
        o_g = sig[:, 3 * H:4 * H]

        c = f_g * c + i_g * g_g
        h = o_g * jnp.tanh(c)

        # Per-step vocab projection: hides in MXU slack of the serial chain and
        # writes a lane-dense (Bp, Vp) block (unmasked vst).
        scores_ref[lo:lo + Bp, :] = (
            jnp.dot(h, w_out, preferred_element_type=jnp.float32) + b_out)

    # Final state, written exactly once.
    h_out_ref[...] = h
    c_out_ref[...] = c


def char_decoder_forward(inputs, params, dec_hidden=None):
    """Pallas equivalent of CharDecoder.forward.

    inputs: (L, B) int32 char ids
    returns: scores (L, B, V) float32, (h_n, c_n) each (1, B, H)
    """
    L, B = inputs.shape
    H = params["w_hh"].shape[0]
    V = params["w_out"].shape[1]

    Bp = _round_up(B, 8)               # sublane-pad the batch
    Vp = _round_up(V, 128)             # lane-dense score output

    # Fold embedding + input projection + bias into one (V, 4H) table; the per-token
    # input contribution becomes a tiny row gather (no MXU matmul, no (L,B,E) buffer).
    ih_table = (params["emb"].astype(jnp.float32) @ params["w_ih"].astype(jnp.float32)
                + params["b"].astype(jnp.float32))                    # (V, 4H)
    gates_x = jnp.take(ih_table, inputs, axis=0)                      # (L, B, 4H)
    if Bp != B:
        gates_x = jnp.pad(gates_x, ((0, 0), (0, Bp - B), (0, 0)))
    gates_x = gates_x.reshape(L * Bp, 4 * H)

    if dec_hidden is None:
        h0 = jnp.zeros((Bp, H), jnp.float32)
        c0 = jnp.zeros((Bp, H), jnp.float32)
    else:
        h0 = dec_hidden[0].reshape(B, H).astype(jnp.float32)
        c0 = dec_hidden[1].reshape(B, H).astype(jnp.float32)
        if Bp != B:
            h0 = jnp.pad(h0, ((0, Bp - B), (0, 0)))
            c0 = jnp.pad(c0, ((0, Bp - B), (0, 0)))

    # Lane-pad the projection so score stores are unmasked full-lane writes.
    w_out = params["w_out"].astype(jnp.float32)
    b_out = params["b_out"].astype(jnp.float32)
    if Vp != V:
        w_out = jnp.pad(w_out, ((0, 0), (0, Vp - V)))
        b_out = jnp.pad(b_out, ((0, 0), (0, Vp - V)))

    vmem = pl.BlockSpec(memory_space=pltpu.MemorySpace.VMEM)

    scores_flat, h_n, c_n = pl.pallas_call(
        lstm_decoder_kernel,
        out_shape=(jax.ShapeDtypeStruct((L * Bp, Vp), jnp.float32),
                   jax.ShapeDtypeStruct((Bp, H), jnp.float32),
                   jax.ShapeDtypeStruct((Bp, H), jnp.float32)),
        in_specs=[vmem] * 6,
        out_specs=(vmem, vmem, vmem),
    )(gates_x, params["w_hh"].astype(jnp.float32), w_out, b_out, h0, c0)

    scores = scores_flat.reshape(L, Bp, Vp)[:, :B, :V]
    return scores, (h_n[:B][None], c_n[:B][None])


def char_decoder_forward_ref(inputs, params, dec_hidden=None):
    """Pure-JAX reference (lax.scan LSTM) for correctness check."""
    emb = jnp.take(params["emb"], inputs, axis=0)  # (L, B, E)
    L, B, _ = emb.shape
    H = params["w_hh"].shape[0]
    if dec_hidden is None:
        h0 = jnp.zeros((B, H), jnp.float32)
        c0 = jnp.zeros((B, H), jnp.float32)
    else:
        h0 = dec_hidden[0].reshape(B, H)
        c0 = dec_hidden[1].reshape(B, H)

    def step(carry, x):
        h, c = carry
        gates = x @ params["w_ih"] + h @ params["w_hh"] + params["b"][0]
        i_g = jax.nn.sigmoid(gates[:, 0 * H:1 * H])
        f_g = jax.nn.sigmoid(gates[:, 1 * H:2 * H])
        g_g = jnp.tanh(gates[:, 2 * H:3 * H])
        o_g = jax.nn.sigmoid(gates[:, 3 * H:4 * H])
        c_new = f_g * c + i_g * g_g
        h_new = o_g * jnp.tanh(c_new)
        return (h_new, c_new), h_new

    (h_n, c_n), hs = lax.scan(step, (h0, c0), emb)
    scores = hs @ params["w_out"] + params["b_out"][0]
    return scores, (h_n[None], c_n[None])


def init_params(key, vocab_size, char_embedding_size, hidden_size, pad_idx):
    """Deterministic synthetic parameters matching the PyTorch module's shapes."""
    ks = jax.random.split(key, 7)
    scale = 0.1
    emb = scale * jax.random.normal(ks[0], (vocab_size, char_embedding_size), jnp.float32)
    emb = emb.at[pad_idx].set(0.0)  # padding_idx row is zero
    # PyTorch LSTM params: weight_ih_l0 (4H, E), weight_hh_l0 (4H, H), biases (4H,)
    w_ih_pt = scale * jax.random.normal(ks[1], (4 * hidden_size, char_embedding_size), jnp.float32)
    w_hh_pt = scale * jax.random.normal(ks[2], (4 * hidden_size, hidden_size), jnp.float32)
    b_ih = scale * jax.random.normal(ks[3], (4 * hidden_size,), jnp.float32)
    b_hh = scale * jax.random.normal(ks[4], (4 * hidden_size,), jnp.float32)
    # Linear: weight (V, H), bias (V,)
    w_out_pt = scale * jax.random.normal(ks[5], (vocab_size, hidden_size), jnp.float32)
    b_out = scale * jax.random.normal(ks[6], (vocab_size,), jnp.float32)
    return {
        "emb": emb,
        "w_ih": w_ih_pt.T,                       # (E, 4H)
        "w_hh": w_hh_pt.T,                       # (H, 4H)
        "b": (b_ih + b_hh)[None, :],             # (1, 4H)
        "w_out": w_out_pt.T,                     # (H, V)
        "b_out": b_out[None, :],                 # (1, V)
    }


if __name__ == "__main__":
    # Small shapes consistent with CharDecoder.forward:
    #   inputs (length=8, batch=4), hidden_size=32, char_embedding_size=50, vocab=30
    L, B = 8, 4
    hidden_size = 32
    char_embedding_size = 50
    vocab_size = 30
    pad_idx = 0

    key = jax.random.PRNGKey(0)
    k_param, k_inp, k_h, k_c = jax.random.split(key, 4)

    params = init_params(k_param, vocab_size, char_embedding_size, hidden_size, pad_idx)
    inputs = jax.random.randint(k_inp, (L, B), 0, vocab_size, dtype=jnp.int32)
    dec_hidden = (0.1 * jax.random.normal(k_h, (1, B, hidden_size), jnp.float32),
                  0.1 * jax.random.normal(k_c, (1, B, hidden_size), jnp.float32))

    fwd = jax.jit(char_decoder_forward)
    scores, (h_n, c_n) = fwd(inputs, params, dec_hidden)
    jax.block_until_ready((scores, h_n, c_n))

    # Verify against a pure-JAX reference.
    scores_ref, (h_ref, c_ref) = char_decoder_forward_ref(inputs, params, dec_hidden)
    assert scores.shape == (L, B, vocab_size)
    assert h_n.shape == (1, B, hidden_size) and c_n.shape == (1, B, hidden_size)
    assert jnp.allclose(scores, scores_ref, rtol=1e-3, atol=1e-3), "scores mismatch"
    assert jnp.allclose(h_n, h_ref, rtol=1e-3, atol=1e-3), "h_n mismatch"
    assert jnp.allclose(c_n, c_ref, rtol=1e-3, atol=1e-3), "c_n mismatch"

    print("KERNEL_OK")
</pallas_src>

<mosaic_0001>
module attributes {stable_mosaic.version = 11 : i64} {
  func.func @lstm_decoder_kernel(%arg0: memref<64x128xf32, #tpu.memory_space<vmem>>, %arg1: memref<32x128xf32, #tpu.memory_space<vmem>>, %arg2: memref<32x128xf32, #tpu.memory_space<vmem>>, %arg3: memref<1x128xf32, #tpu.memory_space<vmem>>, %arg4: memref<8x32xf32, #tpu.memory_space<vmem>>, %arg5: memref<8x32xf32, #tpu.memory_space<vmem>>, %arg6: memref<64x128xf32, #tpu.memory_space<vmem>>, %arg7: memref<8x32xf32, #tpu.memory_space<vmem>>, %arg8: memref<8x32xf32, #tpu.memory_space<vmem>>) attributes {dimension_semantics = [], scalar_prefetch = 0 : i64, scratch_operands = 0 : i64, tpu.core_type = #tpu.core_type<tc>} {
    %c0 = arith.constant 0 : index
    %c0_0 = arith.constant 0 : index
    %0 = vector.load %arg1[%c0, %c0_0] : memref<32x128xf32, #tpu.memory_space<vmem>>, vector<32x128xf32>
    %c0_1 = arith.constant 0 : index
    %c0_2 = arith.constant 0 : index
    %1 = vector.load %arg2[%c0_1, %c0_2] : memref<32x128xf32, #tpu.memory_space<vmem>>, vector<32x128xf32>
    %c0_3 = arith.constant 0 : index
    %c0_4 = arith.constant 0 : index
    %2 = vector.load %arg3[%c0_3, %c0_4] : memref<1x128xf32, #tpu.memory_space<vmem>>, vector<1x128xf32>
    %3 = vector.shape_cast %2 : vector<1x128xf32> to vector<1x128xf32>
    %4 = vector.broadcast %3 : vector<1x128xf32> to vector<8x128xf32>
    %c0_5 = arith.constant 0 : index
    %c0_6 = arith.constant 0 : index
    %5 = vector.load %arg4[%c0_5, %c0_6] : memref<8x32xf32, #tpu.memory_space<vmem>>, vector<8x32xf32>
    %c0_7 = arith.constant 0 : index
    %c0_8 = arith.constant 0 : index
    %6 = vector.load %arg5[%c0_7, %c0_8] : memref<8x32xf32, #tpu.memory_space<vmem>>, vector<8x32xf32>
    %c0_9 = arith.constant 0 : index
    %c0_10 = arith.constant 0 : index
    %7 = vector.load %arg0[%c0_9, %c0_10] : memref<64x128xf32, #tpu.memory_space<vmem>>, vector<8x128xf32>
    %cst = arith.constant dense<0.000000e+00> : vector<8x128xf32>
    %8 = tpu.matmul %5, %0, %cst {dimension_numbers = #tpu.dot_dimension_numbers<[1], [0], [0], [1], [0, 0, 1, 1], [], []>} : vector<8x32xf32>, vector<32x128xf32>, vector<8x128xf32> -> vector<8x128xf32>
    %9 = arith.addf %7, %8 : vector<8x128xf32>
    %10 = arith.negf %9 : vector<8x128xf32>
    %11 = math.exp %10 : vector<8x128xf32>
    %cst_11 = arith.constant 1.000000e+00 : f32
    %12 = vector.broadcast %cst_11 : f32 to vector<8x128xf32>
    %13 = arith.addf %12, %11 : vector<8x128xf32>
    %14 = arith.divf %12, %13 : vector<8x128xf32>
    %15 = math.tanh %9 : vector<8x128xf32>
    %16 = vector.extract_strided_slice %14 {offsets = [0, 0], sizes = [8, 32], strides = [1, 1]} : vector<8x128xf32> to vector<8x32xf32>
    %17 = vector.extract_strided_slice %14 {offsets = [0, 32], sizes = [8, 32], strides = [1, 1]} : vector<8x128xf32> to vector<8x32xf32>
    %18 = vector.extract_strided_slice %15 {offsets = [0, 64], sizes = [8, 32], strides = [1, 1]} : vector<8x128xf32> to vector<8x32xf32>
    %19 = vector.extract_strided_slice %14 {offsets = [0, 96], sizes = [8, 32], strides = [1, 1]} : vector<8x128xf32> to vector<8x32xf32>
    %20 = arith.mulf %17, %6 : vector<8x32xf32>
    %21 = arith.mulf %16, %18 : vector<8x32xf32>
    %22 = arith.addf %20, %21 : vector<8x32xf32>
    %23 = math.tanh %22 : vector<8x32xf32>
    %24 = arith.mulf %19, %23 : vector<8x32xf32>
    %cst_12 = arith.constant dense<0.000000e+00> : vector<8x128xf32>
    %25 = tpu.matmul %24, %1, %cst_12 {dimension_numbers = #tpu.dot_dimension_numbers<[1], [0], [0], [1], [0, 0, 1, 1], [], []>} : vector<8x32xf32>, vector<32x128xf32>, vector<8x128xf32> -> vector<8x128xf32>
    %26 = arith.addf %25, %4 : vector<8x128xf32>
    %c0_13 = arith.constant 0 : index
    %c0_14 = arith.constant 0 : index
    %27 = vector.load %arg6[%c0_13, %c0_14] : memref<64x128xf32, #tpu.memory_space<vmem>>, vector<8x128xf32>
    tpu.vector_store %arg6[%c0_13, %c0_14], %26 {strides = array<i32>} : memref<64x128xf32, #tpu.memory_space<vmem>>, vector<8x128xf32>,
    %c8 = arith.constant 8 : index
    %c0_15 = arith.constant 0 : index
    %28 = vector.load %arg0[%c8, %c0_15] : memref<64x128xf32, #tpu.memory_space<vmem>>, vector<8x128xf32>
    %cst_16 = arith.constant dense<0.000000e+00> : vector<8x128xf32>
    %29 = tpu.matmul %24, %0, %cst_16 {dimension_numbers = #tpu.dot_dimension_numbers<[1], [0], [0], [1], [0, 0, 1, 1], [], []>} : vector<8x32xf32>, vector<32x128xf32>, vector<8x128xf32> -> vector<8x128xf32>
    %30 = arith.addf %28, %29 : vector<8x128xf32>
    %31 = arith.negf %30 : vector<8x128xf32>
    %32 = math.exp %31 : vector<8x128xf32>
    %cst_17 = arith.constant 1.000000e+00 : f32
    %33 = vector.broadcast %cst_17 : f32 to vector<8x128xf32>
    %34 = arith.addf %33, %32 : vector<8x128xf32>
    %35 = arith.divf %33, %34 : vector<8x128xf32>
    %36 = math.tanh %30 : vector<8x128xf32>
    %37 = vector.extract_strided_slice %35 {offsets = [0, 0], sizes = [8, 32], strides = [1, 1]} : vector<8x128xf32> to vector<8x32xf32>
    %38 = vector.extract_strided_slice %35 {offsets = [0, 32], sizes = [8, 32], strides = [1, 1]} : vector<8x128xf32> to vector<8x32xf32>
    %39 = vector.extract_strided_slice %36 {offsets = [0, 64], sizes = [8, 32], strides = [1, 1]} : vector<8x128xf32> to vector<8x32xf32>
    %40 = vector.extract_strided_slice %35 {offsets = [0, 96], sizes = [8, 32], strides = [1, 1]} : vector<8x128xf32> to vector<8x32xf32>
    %41 = arith.mulf %38, %22 : vector<8x32xf32>
    %42 = arith.mulf %37, %39 : vector<8x32xf32>
    %43 = arith.addf %41, %42 : vector<8x32xf32>
    %44 = math.tanh %43 : vector<8x32xf32>
    %45 = arith.mulf %40, %44 : vector<8x32xf32>
    %cst_18 = arith.constant dense<0.000000e+00> : vector<8x128xf32>
    %46 = tpu.matmul %45, %1, %cst_18 {dimension_numbers = #tpu.dot_dimension_numbers<[1], [0], [0], [1], [0, 0, 1, 1], [], []>} : vector<8x32xf32>, vector<32x128xf32>, vector<8x128xf32> -> vector<8x128xf32>
    %47 = arith.addf %46, %4 : vector<8x128xf32>
    %c8_19 = arith.constant 8 : index
    %c0_20 = arith.constant 0 : index
    %48 = vector.load %arg6[%c8_19, %c0_20] : memref<64x128xf32, #tpu.memory_space<vmem>>, vector<8x128xf32>
    tpu.vector_store %arg6[%c8_19, %c0_20], %47 {strides = array<i32>} : memref<64x128xf32, #tpu.memory_space<vmem>>, vector<8x128xf32>,
    %c16 = arith.constant 16 : index
    %c0_21 = arith.constant 0 : index
    %49 = vector.load %arg0[%c16, %c0_21] : memref<64x128xf32, #tpu.memory_space<vmem>>, vector<8x128xf32>
    %cst_22 = arith.constant dense<0.000000e+00> : vector<8x128xf32>
    %50 = tpu.matmul %45, %0, %cst_22 {dimension_numbers = #tpu.dot_dimension_numbers<[1], [0], [0], [1], [0, 0, 1, 1], [], []>} : vector<8x32xf32>, vector<32x128xf32>, vector<8x128xf32> -> vector<8x128xf32>
    %51 = arith.addf %49, %50 : vector<8x128xf32>
    %52 = arith.negf %51 : vector<8x128xf32>
    %53 = math.exp %52 : vector<8x128xf32>
    %cst_23 = arith.constant 1.000000e+00 : f32
    %54 = vector.broadcast %cst_23 : f32 to vector<8x128xf32>
    %55 = arith.addf %54, %53 : vector<8x128xf32>
    %56 = arith.divf %54, %55 : vector<8x128xf32>
    %57 = math.tanh %51 : vector<8x128xf32>
    %58 = vector.extract_strided_slice %56 {offsets = [0, 0], sizes = [8, 32], strides = [1, 1]} : vector<8x128xf32> to vector<8x32xf32>
    %59 = vector.extract_strided_slice %56 {offsets = [0, 32], sizes = [8, 32], strides = [1, 1]} : vector<8x128xf32> to vector<8x32xf32>
    %60 = vector.extract_strided_slice %57 {offsets = [0, 64], sizes = [8, 32], strides = [1, 1]} : vector<8x128xf32> to vector<8x32xf32>
    %61 = vector.extract_strided_slice %56 {offsets = [0, 96], sizes = [8, 32], strides = [1, 1]} : vector<8x128xf32> to vector<8x32xf32>
    %62 = arith.mulf %59, %43 : vector<8x32xf32>
    %63 = arith.mulf %58, %60 : vector<8x32xf32>
    %64 = arith.addf %62, %63 : vector<8x32xf32>
    %65 = math.tanh %64 : vector<8x32xf32>
    %66 = arith.mulf %61, %65 : vector<8x32xf32>
    %cst_24 = arith.constant dense<0.000000e+00> : vector<8x128xf32>
    %67 = tpu.matmul %66, %1, %cst_24 {dimension_numbers = #tpu.dot_dimension_numbers<[1], [0], [0], [1], [0, 0, 1, 1], [], []>} : vector<8x32xf32>, vector<32x128xf32>, vector<8x128xf32> -> vector<8x128xf32>
    %68 = arith.addf %67, %4 : vector<8x128xf32>
    %c16_25 = arith.constant 16 : index
    %c0_26 = arith.constant 0 : index
    %69 = vector.load %arg6[%c16_25, %c0_26] : memref<64x128xf32, #tpu.memory_space<vmem>>, vector<8x128xf32>
    tpu.vector_store %arg6[%c16_25, %c0_26], %68 {strides = array<i32>} : memref<64x128xf32, #tpu.memory_space<vmem>>, vector<8x128xf32>,
    %c24 = arith.constant 24 : index
    %c0_27 = arith.constant 0 : index
    %70 = vector.load %arg0[%c24, %c0_27] : memref<64x128xf32, #tpu.memory_space<vmem>>, vector<8x128xf32>
    %cst_28 = arith.constant dense<0.000000e+00> : vector<8x128xf32>
    %71 = tpu.matmul %66, %0, %cst_28 {dimension_numbers = #tpu.dot_dimension_numbers<[1], [0], [0], [1], [0, 0, 1, 1], [], []>} : vector<8x32xf32>, vector<32x128xf32>, vector<8x128xf32> -> vector<8x128xf32>
    %72 = arith.addf %70, %71 : vector<8x128xf32>
    %73 = arith.negf %72 : vector<8x128xf32>
    %74 = math.exp %73 : vector<8x128xf32>
    %cst_29 = arith.constant 1.000000e+00 : f32
    %75 = vector.broadcast %cst_29 : f32 to vector<8x128xf32>
    %76 = arith.addf %75, %74 : vector<8x128xf32>
    %77 = arith.divf %75, %76 : vector<8x128xf32>
    %78 = math.tanh %72 : vector<8x128xf32>
    %79 = vector.extract_strided_slice %77 {offsets = [0, 0], sizes = [8, 32], strides = [1, 1]} : vector<8x128xf32> to vector<8x32xf32>
    %80 = vector.extract_strided_slice %77 {offsets = [0, 32], sizes = [8, 32], strides = [1, 1]} : vector<8x128xf32> to vector<8x32xf32>
    %81 = vector.extract_strided_slice %78 {offsets = [0, 64], sizes = [8, 32], strides = [1, 1]} : vector<8x128xf32> to vector<8x32xf32>
    %82 = vector.extract_strided_slice %77 {offsets = [0, 96], sizes = [8, 32], strides = [1, 1]} : vector<8x128xf32> to vector<8x32xf32>
    %83 = arith.mulf %80, %64 : vector<8x32xf32>
    %84 = arith.mulf %79, %81 : vector<8x32xf32>
    %85 = arith.addf %83, %84 : vector<8x32xf32>
    %86 = math.tanh %85 : vector<8x32xf32>
    %87 = arith.mulf %82, %86 : vector<8x32xf32>
    %cst_30 = arith.constant dense<0.000000e+00> : vector<8x128xf32>
    %88 = tpu.matmul %87, %1, %cst_30 {dimension_numbers = #tpu.dot_dimension_numbers<[1], [0], [0], [1], [0, 0, 1, 1], [], []>} : vector<8x32xf32>, vector<32x128xf32>, vector<8x128xf32> -> vector<8x128xf32>
    %89 = arith.addf %88, %4 : vector<8x128xf32>
    %c24_31 = arith.constant 24 : index
    %c0_32 = arith.constant 0 : index
    %90 = vector.load %arg6[%c24_31, %c0_32] : memref<64x128xf32, #tpu.memory_space<vmem>>, vector<8x128xf32>
    tpu.vector_store %arg6[%c24_31, %c0_32], %89 {strides = array<i32>} : memref<64x128xf32, #tpu.memory_space<vmem>>, vector<8x128xf32>,
    %c32 = arith.constant 32 : index
    %c0_33 = arith.constant 0 : index
    %91 = vector.load %arg0[%c32, %c0_33] : memref<64x128xf32, #tpu.memory_space<vmem>>, vector<8x128xf32>
    %cst_34 = arith.constant dense<0.000000e+00> : vector<8x128xf32>
    %92 = tpu.matmul %87, %0, %cst_34 {dimension_numbers = #tpu.dot_dimension_numbers<[1], [0], [0], [1], [0, 0, 1, 1], [], []>} : vector<8x32xf32>, vector<32x128xf32>, vector<8x128xf32> -> vector<8x128xf32>
    %93 = arith.addf %91, %92 : vector<8x128xf32>
    %94 = arith.negf %93 : vector<8x128xf32>
    %95 = math.exp %94 : vector<8x128xf32>
    %cst_35 = arith.constant 1.000000e+00 : f32
    %96 = vector.broadcast %cst_35 : f32 to vector<8x128xf32>
    %97 = arith.addf %96, %95 : vector<8x128xf32>
    %98 = arith.divf %96, %97 : vector<8x128xf32>
    %99 = math.tanh %93 : vector<8x128xf32>
    %100 = vector.extract_strided_slice %98 {offsets = [0, 0], sizes = [8, 32], strides = [1, 1]} : vector<8x128xf32> to vector<8x32xf32>
    %101 = vector.extract_strided_slice %98 {offsets = [0, 32], sizes = [8, 32], strides = [1, 1]} : vector<8x128xf32> to vector<8x32xf32>
    %102 = vector.extract_strided_slice %99 {offsets = [0, 64], sizes = [8, 32], strides = [1, 1]} : vector<8x128xf32> to vector<8x32xf32>
    %103 = vector.extract_strided_slice %98 {offsets = [0, 96], sizes = [8, 32], strides = [1, 1]} : vector<8x128xf32> to vector<8x32xf32>
    %104 = arith.mulf %101, %85 : vector<8x32xf32>
    %105 = arith.mulf %100, %102 : vector<8x32xf32>
    %106 = arith.addf %104, %105 : vector<8x32xf32>
    %107 = math.tanh %106 : vector<8x32xf32>
    %108 = arith.mulf %103, %107 : vector<8x32xf32>
    %cst_36 = arith.constant dense<0.000000e+00> : vector<8x128xf32>
    %109 = tpu.matmul %108, %1, %cst_36 {dimension_numbers = #tpu.dot_dimension_numbers<[1], [0], [0], [1], [0, 0, 1, 1], [], []>} : vector<8x32xf32>, vector<32x128xf32>, vector<8x128xf32> -> vector<8x128xf32>
    %110 = arith.addf %109, %4 : vector<8x128xf32>
    %c32_37 = arith.constant 32 : index
    %c0_38 = arith.constant 0 : index
    %111 = vector.load %arg6[%c32_37, %c0_38] : memref<64x128xf32, #tpu.memory_space<vmem>>, vector<8x128xf32>
    tpu.vector_store %arg6[%c32_37, %c0_38], %110 {strides = array<i32>} : memref<64x128xf32, #tpu.memory_space<vmem>>, vector<8x128xf32>,
    %c40 = arith.constant 40 : index
    %c0_39 = arith.constant 0 : index
    %112 = vector.load %arg0[%c40, %c0_39] : memref<64x128xf32, #tpu.memory_space<vmem>>, vector<8x128xf32>
    %cst_40 = arith.constant dense<0.000000e+00> : vector<8x128xf32>
    %113 = tpu.matmul %108, %0, %cst_40 {dimension_numbers = #tpu.dot_dimension_numbers<[1], [0], [0], [1], [0, 0, 1, 1], [], []>} : vector<8x32xf32>, vector<32x128xf32>, vector<8x128xf32> -> vector<8x128xf32>
    %114 = arith.addf %112, %113 : vector<8x128xf32>
    %115 = arith.negf %114 : vector<8x128xf32>
    %116 = math.exp %115 : vector<8x128xf32>
    %cst_41 = arith.constant 1.000000e+00 : f32
    %117 = vector.broadcast %cst_41 : f32 to vector<8x128xf32>
    %118 = arith.addf %117, %116 : vector<8x128xf32>
    %119 = arith.divf %117, %118 : vector<8x128xf32>
    %120 = math.tanh %114 : vector<8x128xf32>
    %121 = vector.extract_strided_slice %119 {offsets = [0, 0], sizes = [8, 32], strides = [1, 1]} : vector<8x128xf32> to vector<8x32xf32>
    %122 = vector.extract_strided_slice %119 {offsets = [0, 32], sizes = [8, 32], strides = [1, 1]} : vector<8x128xf32> to vector<8x32xf32>
    %123 = vector.extract_strided_slice %120 {offsets = [0, 64], sizes = [8, 32], strides = [1, 1]} : vector<8x128xf32> to vector<8x32xf32>
    %124 = vector.extract_strided_slice %119 {offsets = [0, 96], sizes = [8, 32], strides = [1, 1]} : vector<8x128xf32> to vector<8x32xf32>
    %125 = arith.mulf %122, %106 : vector<8x32xf32>
    %126 = arith.mulf %121, %123 : vector<8x32xf32>
    %127 = arith.addf %125, %126 : vector<8x32xf32>
    %128 = math.tanh %127 : vector<8x32xf32>
    %129 = arith.mulf %124, %128 : vector<8x32xf32>
    %cst_42 = arith.constant dense<0.000000e+00> : vector<8x128xf32>
    %130 = tpu.matmul %129, %1, %cst_42 {dimension_numbers = #tpu.dot_dimension_numbers<[1], [0], [0], [1], [0, 0, 1, 1], [], []>} : vector<8x32xf32>, vector<32x128xf32>, vector<8x128xf32> -> vector<8x128xf32>
    %131 = arith.addf %130, %4 : vector<8x128xf32>
    %c40_43 = arith.constant 40 : index
    %c0_44 = arith.constant 0 : index
    %132 = vector.load %arg6[%c40_43, %c0_44] : memref<64x128xf32, #tpu.memory_space<vmem>>, vector<8x128xf32>
    tpu.vector_store %arg6[%c40_43, %c0_44], %131 {strides = array<i32>} : memref<64x128xf32, #tpu.memory_space<vmem>>, vector<8x128xf32>,
    %c48 = arith.constant 48 : index
    %c0_45 = arith.constant 0 : index
    %133 = vector.load %arg0[%c48, %c0_45] : memref<64x128xf32, #tpu.memory_space<vmem>>, vector<8x128xf32>
    %cst_46 = arith.constant dense<0.000000e+00> : vector<8x128xf32>
    %134 = tpu.matmul %129, %0, %cst_46 {dimension_numbers = #tpu.dot_dimension_numbers<[1], [0], [0], [1], [0, 0, 1, 1], [], []>} : vector<8x32xf32>, vector<32x128xf32>, vector<8x128xf32> -> vector<8x128xf32>
    %135 = arith.addf %133, %134 : vector<8x128xf32>
    %136 = arith.negf %135 : vector<8x128xf32>
    %137 = math.exp %136 : vector<8x128xf32>
    %cst_47 = arith.constant 1.000000e+00 : f32
    %138 = vector.broadcast %cst_47 : f32 to vector<8x128xf32>
    %139 = arith.addf %138, %137 : vector<8x128xf32>
    %140 = arith.divf %138, %139 : vector<8x128xf32>
    %141 = math.tanh %135 : vector<8x128xf32>
    %142 = vector.extract_strided_slice %140 {offsets = [0, 0], sizes = [8, 32], strides = [1, 1]} : vector<8x128xf32> to vector<8x32xf32>
    %143 = vector.extract_strided_slice %140 {offsets = [0, 32], sizes = [8, 32], strides = [1, 1]} : vector<8x128xf32> to vector<8x32xf32>
    %144 = vector.extract_strided_slice %141 {offsets = [0, 64], sizes = [8, 32], strides = [1, 1]} : vector<8x128xf32> to vector<8x32xf32>
    %145 = vector.extract_strided_slice %140 {offsets = [0, 96], sizes = [8, 32], strides = [1, 1]} : vector<8x128xf32> to vector<8x32xf32>
    %146 = arith.mulf %143, %127 : vector<8x32xf32>
    %147 = arith.mulf %142, %144 : vector<8x32xf32>
    %148 = arith.addf %146, %147 : vector<8x32xf32>
    %149 = math.tanh %148 : vector<8x32xf32>
    %150 = arith.mulf %145, %149 : vector<8x32xf32>
    %cst_48 = arith.constant dense<0.000000e+00> : vector<8x128xf32>
    %151 = tpu.matmul %150, %1, %cst_48 {dimension_numbers = #tpu.dot_dimension_numbers<[1], [0], [0], [1], [0, 0, 1, 1], [], []>} : vector<8x32xf32>, vector<32x128xf32>, vector<8x128xf32> -> vector<8x128xf32>
    %152 = arith.addf %151, %4 : vector<8x128xf32>
    %c48_49 = arith.constant 48 : index
    %c0_50 = arith.constant 0 : index
    %153 = vector.load %arg6[%c48_49, %c0_50] : memref<64x128xf32, #tpu.memory_space<vmem>>, vector<8x128xf32>
    tpu.vector_store %arg6[%c48_49, %c0_50], %152 {strides = array<i32>} : memref<64x128xf32, #tpu.memory_space<vmem>>, vector<8x128xf32>,
    %c56 = arith.constant 56 : index
    %c0_51 = arith.constant 0 : index
    %154 = vector.load %arg0[%c56, %c0_51] : memref<64x128xf32, #tpu.memory_space<vmem>>, vector<8x128xf32>
    %cst_52 = arith.constant dense<0.000000e+00> : vector<8x128xf32>
    %155 = tpu.matmul %150, %0, %cst_52 {dimension_numbers = #tpu.dot_dimension_numbers<[1], [0], [0], [1], [0, 0, 1, 1], [], []>} : vector<8x32xf32>, vector<32x128xf32>, vector<8x128xf32> -> vector<8x128xf32>
    %156 = arith.addf %154, %155 : vector<8x128xf32>
    %157 = arith.negf %156 : vector<8x128xf32>
    %158 = math.exp %157 : vector<8x128xf32>
    %cst_53 = arith.constant 1.000000e+00 : f32
    %159 = vector.broadcast %cst_53 : f32 to vector<8x128xf32>
    %160 = arith.addf %159, %158 : vector<8x128xf32>
    %161 = arith.divf %159, %160 : vector<8x128xf32>
    %162 = math.tanh %156 : vector<8x128xf32>
    %163 = vector.extract_strided_slice %161 {offsets = [0, 0], sizes = [8, 32], strides = [1, 1]} : vector<8x128xf32> to vector<8x32xf32>
    %164 = vector.extract_strided_slice %161 {offsets = [0, 32], sizes = [8, 32], strides = [1, 1]} : vector<8x128xf32> to vector<8x32xf32>
    %165 = vector.extract_strided_slice %162 {offsets = [0, 64], sizes = [8, 32], strides = [1, 1]} : vector<8x128xf32> to vector<8x32xf32>
    %166 = vector.extract_strided_slice %161 {offsets = [0, 96], sizes = [8, 32], strides = [1, 1]} : vector<8x128xf32> to vector<8x32xf32>
    %167 = arith.mulf %164, %148 : vector<8x32xf32>
    %168 = arith.mulf %163, %165 : vector<8x32xf32>
    %169 = arith.addf %167, %168 : vector<8x32xf32>
    %170 = math.tanh %169 : vector<8x32xf32>
    %171 = arith.mulf %166, %170 : vector<8x32xf32>
    %cst_54 = arith.constant dense<0.000000e+00> : vector<8x128xf32>
    %172 = tpu.matmul %171, %1, %cst_54 {dimension_numbers = #tpu.dot_dimension_numbers<[1], [0], [0], [1], [0, 0, 1, 1], [], []>} : vector<8x32xf32>, vector<32x128xf32>, vector<8x128xf32> -> vector<8x128xf32>
    %173 = arith.addf %172, %4 : vector<8x128xf32>
    %c56_55 = arith.constant 56 : index
    %c0_56 = arith.constant 0 : index
    %174 = vector.load %arg6[%c56_55, %c0_56] : memref<64x128xf32, #tpu.memory_space<vmem>>, vector<8x128xf32>
    tpu.vector_store %arg6[%c56_55, %c0_56], %173 {strides = array<i32>} : memref<64x128xf32, #tpu.memory_space<vmem>>, vector<8x128xf32>,
    %c0_57 = arith.constant 0 : index
    %c0_58 = arith.constant 0 : index
    %175 = vector.load %arg7[%c0_57, %c0_58] : memref<8x32xf32, #tpu.memory_space<vmem>>, vector<8x32xf32>
    tpu.vector_store %arg7[%c0_57, %c0_58], %171 {strides = array<i32>} : memref<8x32xf32, #tpu.memory_space<vmem>>, vector<8x32xf32>,
    %c0_59 = arith.constant 0 : index
    %c0_60 = arith.constant 0 : index
    %176 = vector.load %arg8[%c0_59, %c0_60] : memref<8x32xf32, #tpu.memory_space<vmem>>, vector<8x32xf32>
    tpu.vector_store %arg8[%c0_59, %c0_60], %169 {strides = array<i32>} : memref<8x32xf32, #tpu.memory_space<vmem>>, vector<8x32xf32>,
    return
  }
}

</mosaic_0001>

<llo_original>
// kernel: char_decoder_forward.1
$region0: #{char_decoder_forward.1}
  #allocation0 [shape = 'u32[]', space=smem, size = 0x4, offset = 0x4, fixed_abs, tag = 'smem constant byte address 0x4 - core index']
  #allocation1 [shape = 'u32[144,128]{1,0:T(1,128)}', space=vmem, size = 0x12000, scoped, tag = 'internal scratch']
  %s0 = inlined_call_operand.vmem [shape: f32[64,128], index: 0, kind: input, shape index: {}]
  %s1 = inlined_call_operand.vmem [shape: f32[32,128], index: 1, kind: input, shape index: {}]
  %s2 = inlined_call_operand.vmem [shape: f32[32,128], index: 2, kind: input, shape index: {}]
  %s3 = inlined_call_operand.vmem [shape: f32[1,128], index: 3, kind: input, shape index: {}]
  %s4 = inlined_call_operand.vmem [shape: f32[8,32], index: 4, kind: input, shape index: {}]
  %s5 = inlined_call_operand.vmem [shape: f32[8,32], index: 5, kind: input, shape index: {}]
  %s6 = inlined_call_operand.vmem [shape: f32[64,128], index: 6, kind: output, shape index: {0}]
  %s7 = inlined_call_operand.vmem [shape: f32[8,32], index: 7, kind: output, shape index: {1}]
  %s8 = inlined_call_operand.vmem [shape: f32[8,32], index: 8, kind: output, shape index: {2}]
  %9 = xla_tuple %s6, %s7, %s8
  %s10 = sld [smem:[#allocation0]]
  $region50: #{char_decoder_forward.1} parent=0
    _
  %s12 = ssub.s32 1, %s10
  %s13 = scalar_select 0, %s12, %s10
  // Predicated region
  $region2: #{char_decoder_forward.1} parent=0 // pred_check
    _
  $region3: #{char_decoder_forward.1} parent=0 // pred_check_branch
    %15 = sbr.rel (0) target = $region5
  $region4: #{char_decoder_forward.1} parent=0 // pred_region
    _
  $region5: #{char_decoder_forward.1} parent=0 // pred_fallthru
    _
  // Predicated region
  $region6: #{char_decoder_forward.1} parent=0 // pred_check
    _
  $region7: #{char_decoder_forward.1} parent=0 // pred_check_branch
    %17 = sbr.rel (0) target = $region9
  $region8: #{char_decoder_forward.1} parent=0 // pred_region
    _
  $region9: #{char_decoder_forward.1} parent=0 // pred_fallthru
    _
  // Predicated region
  $region10: #{char_decoder_forward.1} parent=0 // pred_check
    _
  $region11: #{char_decoder_forward.1} parent=0 // pred_check_branch
    %19 = sbr.rel (0) target = $region13
  $region12: #{char_decoder_forward.1} parent=0 // pred_region
    _
  $region13: #{char_decoder_forward.1} parent=0 // pred_fallthru
    _
  // Predicated region
  $region14: #{char_decoder_forward.1} parent=0 // pred_check
    _
  $region15: #{char_decoder_forward.1} parent=0 // pred_check_branch
    %21 = sbr.rel (0) target = $region17
  $region16: #{char_decoder_forward.1} parent=0 // pred_region
    _
  $region17: #{char_decoder_forward.1} parent=0 // pred_fallthru
    _
  // Predicated region
  $region18: #{char_decoder_forward.1} parent=0 // pred_check
    _
  $region19: #{char_decoder_forward.1} parent=0 // pred_check_branch
    %23 = sbr.rel (0) target = $region21
  $region20: #{char_decoder_forward.1} parent=0 // pred_region
    _
  $region21: #{char_decoder_forward.1} parent=0 // pred_fallthru
    _
  // Predicated region
  $region22: #{char_decoder_forward.1} parent=0 // pred_check
    _
  $region23: #{char_decoder_forward.1} parent=0 // pred_check_branch
    %25 = sbr.rel (0) target = $region25
  $region24: #{char_decoder_forward.1} parent=0 // pred_region
    _
  $region25: #{char_decoder_forward.1} parent=0 // pred_fallthru
    _
  %v26 = vld [vmem:[%s1] sm:$0xff]
  %v27 = vld [vmem:[%s1 + $0x8] sm:$0xff]
  %v28 = vld [vmem:[%s1 + $0x10] sm:$0xff]
  %v29 = vld [vmem:[%s1 + $0x18] sm:$0xff]
  %v30 = vld [vmem:[%s2] sm:$0xff]
  %v31 = vld [vmem:[%s2 + $0x8] sm:$0xff]
  %v32 = vld [vmem:[%s2 + $0x10] sm:$0xff]
  %v33 = vld [vmem:[%s2 + $0x18] sm:$0xff]
  %v34 = vld [vmem:[%s3] sm:$0x1]
  %v36 = vlaneseq
  %v37 = vshrl.u32 %v36, 7
  %v38 = vsub.s32 0, %v37
  %v39 = vrot.slane %v34, %v38
  %v41 = vld [vmem:[%s4] sm:$0xff]
  %v42 = vld [vmem:[%s5] sm:$0xff]
  %v43 = vld [vmem:[%s0] sm:$0xff]
  %vm44 = vcmask 261120
  %v46 = vsel %vm44, %v41, 0
  %48 = vmatprep.subr.mxu0 0.0
  %49 = vmatpush1.msra.mxu0 %v26
  %50 = vmatprep.subr.mxu0 0.0
  %51 = vmatpush1.msra.mxu0 %v27
  %52 = vmatprep.subr.mxu0 0.0
  %53 = vmatpush1.msra.mxu0 %v28
  %54 = vmatprep.subr.mxu0 0.0
  %55 = vmatpush1.msra.mxu0 %v29
  %56 = vmatprep.subr.mxu0 0.0
  %57 = vmatpush1.msra.mxu0 0.0
  %58 = vmatprep.subr.mxu0 0.0
  %59 = vmatpush1.msra.mxu0 0.0
  %60 = vmatprep.subr.mxu0 0.0
  %61 = vmatpush1.msra.mxu0 0.0
  %62 = vmatprep.subr.mxu0 0.0
  %63 = vmatpush1.msra.mxu0 0.0
  %64 = vmatprep.subr.mxu0 0.0
  %65 = vmatpush1.msra.mxu0 0.0
  %66 = vmatprep.subr.mxu0 0.0
  %67 = vmatpush1.msra.mxu0 0.0
  %68 = vmatprep.subr.mxu0 0.0
  %69 = vmatpush1.msra.mxu0 0.0
  %70 = vmatprep.subr.mxu0 0.0
  %71 = vmatpush1.msra.mxu0 0.0
  %72 = vmatprep.subr.mxu0 0.0
  %73 = vmatpush1.msra.mxu0 0.0
  %74 = vmatprep.subr.mxu0 0.0
  %75 = vmatpush1.msra.mxu0 0.0
  %76 = vmatprep.subr.mxu0 0.0
  %77 = vmatpush1.msra.mxu0 0.0
  %78 = vmatprep.subr.mxu0 0.0
  %79 = vmatpush1.msra.mxu0 0.0
  %80 = vmatprep.subr.mxu0 0.0
  %81 = vmatpush1.msra.mxu0 0.0
  %82 = vmatprep.subr.mxu0 0.0
  %83 = vmatpush1.msra.mxu0 0.0
  %84 = vmatprep.subr.mxu0 0.0
  %85 = vmatpush1.msra.mxu0 0.0
  %86 = vmatprep.subr.mxu0 0.0
  %87 = vmatpush1.msra.mxu0 0.0
  %88 = vmatprep.subr.mxu0 0.0
  %89 = vmatpush1.msra.mxu0 0.0
  %90 = vmatprep.subr.mxu0 0.0
  %91 = vmatpush1.msra.mxu0 0.0
  %92 = vmatprep.subr.mxu0 0.0
  %93 = vmatpush1.msra.mxu0 0.0
  %94 = vmatprep.subr.mxu0 0.0
  %95 = vmatpush1.msra.mxu0 0.0
  %96 = vmatprep.subr.mxu0 0.0
  %97 = vmatpush1.msra.mxu0 0.0
  %98 = vmatprep.subr.mxu0 0.0
  %99 = vmatpush1.msra.mxu0 0.0
  %100 = vmatprep.subr.mxu0 0.0
  %101 = vmatpush1.msra.mxu0 0.0
  %102 = vmatprep.subr.mxu0 0.0
  %103 = vmatpush1.msra.mxu0 0.0
  %104 = vmatprep.subr.mxu0 0.0
  %105 = vmatpush1.msra.mxu0 0.0
  %106 = vmatprep.subr.mxu0 0.0
  %107 = vmatpush1.msra.mxu0 0.0
  %108 = vmatprep.subr.mxu0 0.0
  %109 = vmatpush1.msra.mxu0 0.0
  %110 = vmatprep.subr.mxu0 0.0
  %111 = vmatpush1.msra.mxu0 0.0
  %112 = vmatprep.mubr.f32.mxu0 0.0
  %113 = vmatmul.mubr.f32.gmra.mrb[0].mxu0 %v46
  %v114 = vpop.f32.mrb[0].mxu0
  %v115 = vadd.f32 0.0, %v114
  %v116 = vpop.f32.mrb[0].mxu0
  %117 = vdwg.mxu0
  %v118 = vadd.f32 %v43, %v115
  %v119 = vxor.u32 %v118, 2147483648
  %v120 = vmul.f32 %v119, 1.442695
  %v121 = vpow.pop %v120
  %v122 = vadd.f32 %v121, 1.0
  %v123 = vrcp.pop %v122
  %v124 = vmul.f32 1.0, %v123
  %v125 = vtanh.pop %v118
  %127 = vrot.lane.b32.xlu0 %v42, 32
  %v128 = vpop.permute.xlu0 %127
  %v130 = vmul.f32 %v124, %v128
  %132 = vrot.lane.b32.xlu0 %v125, 64
  %v133 = vpop.permute.xlu0 %132
  %v135 = vmul.f32 %v124, %v133
  %137 = vrot.lane.b32.xlu0 %v135, 32
  %v138 = vpop.permute.xlu0 %137
  %v140 = vadd.f32 %v130, %v138
  %v141 = vtanh.pop %v140
  %143 = vrot.lane.b32.xlu0 %v141, 64
  %v144 = vpop.permute.xlu0 %143
  %v146 = vmul.f32 %v124, %v144
  %148 = vrot.lane.b32.xlu0 %v146, 32
  %v149 = vpop.permute.xlu0 %148
  %v150 = vsel %vm44, %v149, 0
  %152 = vmatprep.subr.mxu0 0.0
  %153 = vmatpush1.msra.mxu0 %v30
  %154 = vmatprep.subr.mxu0 0.0
  %155 = vmatpush1.msra.mxu0 %v31
  %156 = vmatprep.subr.mxu0 0.0
  %157 = vmatpush1.msra.mxu0 %v32
  %158 = vmatprep.subr.mxu0 0.0
  %159 = vmatpush1.msra.mxu0 %v33
  %160 = vmatprep.subr.mxu0 0.0
  %161 = vmatpush1.msra.mxu0 0.0
  %162 = vmatprep.subr.mxu0 0.0
  %163 = vmatpush1.msra.mxu0 0.0
  %164 = vmatprep.subr.mxu0 0.0
  %165 = vmatpush1.msra.mxu0 0.0
  %166 = vmatprep.subr.mxu0 0.0
  %167 = vmatpush1.msra.mxu0 0.0
  %168 = vmatprep.subr.mxu0 0.0
  %169 = vmatpush1.msra.mxu0 0.0
  %170 = vmatprep.subr.mxu0 0.0
  %171 = vmatpush1.msra.mxu0 0.0
  %172 = vmatprep.subr.mxu0 0.0
  %173 = vmatpush1.msra.mxu0 0.0
  %174 = vmatprep.subr.mxu0 0.0
  %175 = vmatpush1.msra.mxu0 0.0
  %176 = vmatprep.subr.mxu0 0.0
  %177 = vmatpush1.msra.mxu0 0.0
  %178 = vmatprep.subr.mxu0 0.0
  %179 = vmatpush1.msra.mxu0 0.0
  %180 = vmatprep.subr.mxu0 0.0
  %181 = vmatpush1.msra.mxu0 0.0
  %182 = vmatprep.subr.mxu0 0.0
  %183 = vmatpush1.msra.mxu0 0.0
  %184 = vmatprep.subr.mxu0 0.0
  %185 = vmatpush1.msra.mxu0 0.0
  %186 = vmatprep.subr.mxu0 0.0
  %187 = vmatpush1.msra.mxu0 0.0
  %188 = vmatprep.subr.mxu0 0.0
  %189 = vmatpush1.msra.mxu0 0.0
  %190 = vmatprep.subr.mxu0 0.0
  %191 = vmatpush1.msra.mxu0 0.0
  %192 = vmatprep.subr.mxu0 0.0
  %193 = vmatpush1.msra.mxu0 0.0
  %194 = vmatprep.subr.mxu0 0.0
  %195 = vmatpush1.msra.mxu0 0.0
  %196 = vmatprep.subr.mxu0 0.0
  %197 = vmatpush1.msra.mxu0 0.0
  %198 = vmatprep.subr.mxu0 0.0
  %199 = vmatpush1.msra.mxu0 0.0
  %200 = vmatprep.subr.mxu0 0.0
  %201 = vmatpush1.msra.mxu0 0.0
  %202 = vmatprep.subr.mxu0 0.0
  %203 = vmatpush1.msra.mxu0 0.0
  %204 = vmatprep.subr.mxu0 0.0
  %205 = vmatpush1.msra.mxu0 0.0
  %206 = vmatprep.subr.mxu0 0.0
  %207 = vmatpush1.msra.mxu0 0.0
  %208 = vmatprep.subr.mxu0 0.0
  %209 = vmatpush1.msra.mxu0 0.0
  %210 = vmatprep.subr.mxu0 0.0
  %211 = vmatpush1.msra.mxu0 0.0
  %212 = vmatprep.subr.mxu0 0.0
  %213 = vmatpush1.msra.mxu0 0.0
  %214 = vmatprep.subr.mxu0 0.0
  %215 = vmatpush1.msra.mxu0 0.0
  %216 = vmatprep.mubr.f32.mxu0 0.0
  %217 = vmatmul.mubr.f32.gmra.mrb[0].mxu0 %v150
  %v218 = vpop.f32.mrb[0].mxu0
  %v219 = vadd.f32 %v39, %v218
  %v220 = vpop.f32.mrb[0].mxu0
  %221 = vdwg.mxu0
  %222 = vst [vmem:[%s6] sm:$0xff] %v219
  %v223 = vld [vmem:[%s0 + $0x8] sm:$0xff]
  %224 = vmatprep.subr.mxu0 0.0
  %225 = vmatpush1.msra.mxu0 %v26
  %226 = vmatprep.subr.mxu0 0.0
  %227 = vmatpush1.msra.mxu0 %v27
  %228 = vmatprep.subr.mxu0 0.0
  %229 = vmatpush1.msra.mxu0 %v28
  %230 = vmatprep.subr.mxu0 0.0
  %231 = vmatpush1.msra.mxu0 %v29
  %232 = vmatprep.subr.mxu0 0.0
  %233 = vmatpush1.msra.mxu0 0.0
  %234 = vmatprep.subr.mxu0 0.0
  %235 = vmatpush1.msra.mxu0 0.0
  %236 = vmatprep.subr.mxu0 0.0
  %237 = vmatpush1.msra.mxu0 0.0
  %238 = vmatprep.subr.mxu0 0.0
  %239 = vmatpush1.msra.mxu0 0.0
  %240 = vmatprep.subr.mxu0 0.0
  %241 = vmatpush1.msra.mxu0 0.0
  %242 = vmatprep.subr.mxu0 0.0
  %243 = vmatpush1.msra.mxu0 0.0
  %244 = vmatprep.subr.mxu0 0.0
  %245 = vmatpush1.msra.mxu0 0.0
  %246 = vmatprep.subr.mxu0 0.0
  %247 = vmatpush1.msra.mxu0 0.0
  %248 = vmatprep.subr.mxu0 0.0
  %249 = vmatpush1.msra.mxu0 0.0
  %250 = vmatprep.subr.mxu0 0.0
  %251 = vmatpush1.msra.mxu0 0.0
  %252 = vmatprep.subr.mxu0 0.0
  %253 = vmatpush1.msra.mxu0 0.0
  %254 = vmatprep.subr.mxu0 0.0
  %255 = vmatpush1.msra.mxu0 0.0
  %256 = vmatprep.subr.mxu0 0.0
  %257 = vmatpush1.msra.mxu0 0.0
  %258 = vmatprep.subr.mxu0 0.0
  %259 = vmatpush1.msra.mxu0 0.0
  %260 = vmatprep.subr.mxu0 0.0
  %261 = vmatpush1.msra.mxu0 0.0
  %262 = vmatprep.subr.mxu0 0.0
  %263 = vmatpush1.msra.mxu0 0.0
  %264 = vmatprep.subr.mxu0 0.0
  %265 = vmatpush1.msra.mxu0 0.0
  %266 = vmatprep.subr.mxu0 0.0
  %267 = vmatpush1.msra.mxu0 0.0
  %268 = vmatprep.subr.mxu0 0.0
  %269 = vmatpush1.msra.mxu0 0.0
  %270 = vmatprep.subr.mxu0 0.0
  %271 = vmatpush1.msra.mxu0 0.0
  %272 = vmatprep.subr.mxu0 0.0
  %273 = vmatpush1.msra.mxu0 0.0
  %274 = vmatprep.subr.mxu0 0.0
  %275 = vmatpush1.msra.mxu0 0.0
  %276 = vmatprep.subr.mxu0 0.0
  %277 = vmatpush1.msra.mxu0 0.0
  %278 = vmatprep.subr.mxu0 0.0
  %279 = vmatpush1.msra.mxu0 0.0
  %280 = vmatprep.subr.mxu0 0.0
  %281 = vmatpush1.msra.mxu0 0.0
  %282 = vmatprep.subr.mxu0 0.0
  %283 = vmatpush1.msra.mxu0 0.0
  %284 = vmatprep.subr.mxu0 0.0
  %285 = vmatpush1.msra.mxu0 0.0
  %286 = vmatprep.subr.mxu0 0.0
  %287 = vmatpush1.msra.mxu0 0.0
  %288 = vmatprep.mubr.f32.mxu0 0.0
  %289 = vmatmul.mubr.f32.gmra.mrb[0].mxu0 %v150
  %v290 = vpop.f32.mrb[0].mxu0
  %v291 = vadd.f32 0.0, %v290
  %v292 = vpop.f32.mrb[0].mxu0
  %293 = vdwg.mxu0
  %v294 = vadd.f32 %v223, %v291
  %v295 = vxor.u32 %v294, 2147483648
  %v296 = vmul.f32 %v295, 1.442695
  %v297 = vpow.pop %v296
  %v298 = vadd.f32 %v297, 1.0
  %v299 = vrcp.pop %v298
  %v300 = vmul.f32 1.0, %v299
  %v301 = vtanh.pop %v294
  %v302 = vmul.f32 %v300, %v140
  %304 = vrot.lane.b32.xlu0 %v301, 64
  %v305 = vpop.permute.xlu0 %304
  %v307 = vmul.f32 %v300, %v305
  %309 = vrot.lane.b32.xlu0 %v307, 32
  %v310 = vpop.permute.xlu0 %309
  %v312 = vadd.f32 %v302, %v310
  %v313 = vtanh.pop %v312
  %315 = vrot.lane.b32.xlu0 %v313, 64
  %v316 = vpop.permute.xlu0 %315
  %v318 = vmul.f32 %v300, %v316
  %320 = vrot.lane.b32.xlu0 %v318, 32
  %v321 = vpop.permute.xlu0 %320
  %v322 = vsel %vm44, %v321, 0
  %324 = vmatprep.subr.mxu0 0.0
  %325 = vmatpush1.msra.mxu0 %v30
  %326 = vmatprep.subr.mxu0 0.0
  %327 = vmatpush1.msra.mxu0 %v31
  %328 = vmatprep.subr.mxu0 0.0
  %329 = vmatpush1.msra.mxu0 %v32
  %330 = vmatprep.subr.mxu0 0.0
  %331 = vmatpush1.msra.mxu0 %v33
  %332 = vmatprep.subr.mxu0 0.0
  %333 = vmatpush1.msra.mxu0 0.0
  %334 = vmatprep.subr.mxu0 0.0
  %335 = vmatpush1.msra.mxu0 0.0
  %336 = vmatprep.subr.mxu0 0.0
  %337 = vmatpush1.msra.mxu0 0.0
  %338 = vmatprep.subr.mxu0 0.0
  %339 = vmatpush1.msra.mxu0 0.0
  %340 = vmatprep.subr.mxu0 0.0
  %341 = vmatpush1.msra.mxu0 0.0
  %342 = vmatprep.subr.mxu0 0.0
  %343 = vmatpush1.msra.mxu0 0.0
  %344 = vmatprep.subr.mxu0 0.0
  %345 = vmatpush1.msra.mxu0 0.0
  %346 = vmatprep.subr.mxu0 0.0
  %347 = vmatpush1.msra.mxu0 0.0
  %348 = vmatprep.subr.mxu0 0.0
  %349 = vmatpush1.msra.mxu0 0.0
  %350 = vmatprep.subr.mxu0 0.0
  %351 = vmatpush1.msra.mxu0 0.0
  %352 = vmatprep.subr.mxu0 0.0
  %353 = vmatpush1.msra.mxu0 0.0
  %354 = vmatprep.subr.mxu0 0.0
  %355 = vmatpush1.msra.mxu0 0.0
  %356 = vmatprep.subr.mxu0 0.0
  %357 = vmatpush1.msra.mxu0 0.0
  %358 = vmatprep.subr.mxu0 0.0
  %359 = vmatpush1.msra.mxu0 0.0
  %360 = vmatprep.subr.mxu0 0.0
  %361 = vmatpush1.msra.mxu0 0.0
  %362 = vmatprep.subr.mxu0 0.0
  %363 = vmatpush1.msra.mxu0 0.0
  %364 = vmatprep.subr.mxu0 0.0
  %365 = vmatpush1.msra.mxu0 0.0
  %366 = vmatprep.subr.mxu0 0.0
  %367 = vmatpush1.msra.mxu0 0.0
  %368 = vmatprep.subr.mxu0 0.0
  %369 = vmatpush1.msra.mxu0 0.0
  %370 = vmatprep.subr.mxu0 0.0
  %371 = vmatpush1.msra.mxu0 0.0
  %372 = vmatprep.subr.mxu0 0.0
  %373 = vmatpush1.msra.mxu0 0.0
  %374 = vmatprep.subr.mxu0 0.0
  %375 = vmatpush1.msra.mxu0 0.0
  %376 = vmatprep.subr.mxu0 0.0
  %377 = vmatpush1.msra.mxu0 0.0
  %378 = vmatprep.subr.mxu0 0.0
  %379 = vmatpush1.msra.mxu0 0.0
  %380 = vmatprep.subr.mxu0 0.0
  %381 = vmatpush1.msra.mxu0 0.0
  %382 = vmatprep.subr.mxu0 0.0
  %383 = vmatpush1.msra.mxu0 0.0
  %384 = vmatprep.subr.mxu0 0.0
  %385 = vmatpush1.msra.mxu0 0.0
  %386 = vmatprep.subr.mxu0 0.0
  %387 = vmatpush1.msra.mxu0 0.0
  %388 = vmatprep.mubr.f32.mxu0 0.0
  %389 = vmatmul.mubr.f32.gmra.mrb[0].mxu0 %v322
  %v390 = vpop.f32.mrb[0].mxu0
  %v391 = vadd.f32 %v39, %v390
  %v392 = vpop.f32.mrb[0].mxu0
  %393 = vdwg.mxu0
  %394 = vst [vmem:[%s6 + $0x8] sm:$0xff] %v391
  %v395 = vld [vmem:[%s0 + $0x10] sm:$0xff]
  %396 = vmatprep.subr.mxu0 0.0
  %397 = vmatpush1.msra.mxu0 %v26
  %398 = vmatprep.subr.mxu0 0.0
  %399 = vmatpush1.msra.mxu0 %v27
  %400 = vmatprep.subr.mxu0 0.0
  %401 = vmatpush1.msra.mxu0 %v28
  %402 = vmatprep.subr.mxu0 0.0
  %403 = vmatpush1.msra.mxu0 %v29
  %404 = vmatprep.subr.mxu0 0.0
  %405 = vmatpush1.msra.mxu0 0.0
  %406 = vmatprep.subr.mxu0 0.0
  %407 = vmatpush1.msra.mxu0 0.0
  %408 = vmatprep.subr.mxu0 0.0
  %409 = vmatpush1.msra.mxu0 0.0
  %410 = vmatprep.subr.mxu0 0.0
  %411 = vmatpush1.msra.mxu0 0.0
  %412 = vmatprep.subr.mxu0 0.0
  %413 = vmatpush1.msra.mxu0 0.0
  %414 = vmatprep.subr.mxu0 0.0
  %415 = vmatpush1.msra.mxu0 0.0
  %416 = vmatprep.subr.mxu0 0.0
  %417 = vmatpush1.msra.mxu0 0.0
  %418 = vmatprep.subr.mxu0 0.0
  %419 = vmatpush1.msra.mxu0 0.0
  %420 = vmatprep.subr.mxu0 0.0
  %421 = vmatpush1.msra.mxu0 0.0
  %422 = vmatprep.subr.mxu0 0.0
  %423 = vmatpush1.msra.mxu0 0.0
  %424 = vmatprep.subr.mxu0 0.0
  %425 = vmatpush1.msra.mxu0 0.0
  %426 = vmatprep.subr.mxu0 0.0
  %427 = vmatpush1.msra.mxu0 0.0
  %428 = vmatprep.subr.mxu0 0.0
  %429 = vmatpush1.msra.mxu0 0.0
  %430 = vmatprep.subr.mxu0 0.0
  %431 = vmatpush1.msra.mxu0 0.0
  %432 = vmatprep.subr.mxu0 0.0
  %433 = vmatpush1.msra.mxu0 0.0
  %434 = vmatprep.subr.mxu0 0.0
  %435 = vmatpush1.msra.mxu0 0.0
  %436 = vmatprep.subr.mxu0 0.0
  %437 = vmatpush1.msra.mxu0 0.0
  %438 = vmatprep.subr.mxu0 0.0
  %439 = vmatpush1.msra.mxu0 0.0
  %440 = vmatprep.subr.mxu0 0.0
  %441 = vmatpush1.msra.mxu0 0.0
  %442 = vmatprep.subr.mxu0 0.0
  %443 = vmatpush1.msra.mxu0 0.0
  %444 = vmatprep.subr.mxu0 0.0
  %445 = vmatpush1.msra.mxu0 0.0
  %446 = vmatprep.subr.mxu0 0.0
  %447 = vmatpush1.msra.mxu0 0.0
  %448 = vmatprep.subr.mxu0 0.0
  %449 = vmatpush1.msra.mxu0 0.0
  %450 = vmatprep.subr.mxu0 0.0
  %451 = vmatpush1.msra.mxu0 0.0
  %452 = vmatprep.subr.mxu0 0.0
  %453 = vmatpush1.msra.mxu0 0.0
  %454 = vmatprep.subr.mxu0 0.0
  %455 = vmatpush1.msra.mxu0 0.0
  %456 = vmatprep.subr.mxu0 0.0
  %457 = vmatpush1.msra.mxu0 0.0
  %458 = vmatprep.subr.mxu0 0.0
  %459 = vmatpush1.msra.mxu0 0.0
  %460 = vmatprep.mubr.f32.mxu0 0.0
  %461 = vmatmul.mubr.f32.gmra.mrb[0].mxu0 %v322
  %v462 = vpop.f32.mrb[0].mxu0
  %v463 = vadd.f32 0.0, %v462
  %v464 = vpop.f32.mrb[0].mxu0
  %465 = vdwg.mxu0
  %v466 = vadd.f32 %v395, %v463
  %v467 = vxor.u32 %v466, 2147483648
  %v468 = vmul.f32 %v467, 1.442695
  %v469 = vpow.pop %v468
  %v470 = vadd.f32 %v469, 1.0
  %v471 = vrcp.pop %v470
  %v472 = vmul.f32 1.0, %v471
  %v473 = vtanh.pop %v466
  %v474 = vmul.f32 %v472, %v312
  %476 = vrot.lane.b32.xlu0 %v473, 64
  %v477 = vpop.permute.xlu0 %476
  %v479 = vmul.f32 %v472, %v477
  %481 = vrot.lane.b32.xlu0 %v479, 32
  %v482 = vpop.permute.xlu0 %481
  %v484 = vadd.f32 %v474, %v482
  %v485 = vtanh.pop %v484
  %487 = vrot.lane.b32.xlu0 %v485, 64
  %v488 = vpop.permute.xlu0 %487
  %v490 = vmul.f32 %v472, %v488
  %492 = vrot.lane.b32.xlu0 %v490, 32
  %v493 = vpop.permute.xlu0 %492
  %v494 = vsel %vm44, %v493, 0
  %496 = vmatprep.subr.mxu0 0.0
  %497 = vmatpush1.msra.mxu0 %v30
  %498 = vmatprep.subr.mxu0 0.0
  %499 = vmatpush1.msra.mxu0 %v31
  %500 = vmatprep.subr.mxu0 0.0
  %501 = vmatpush1.msra.mxu0 %v32
  %502 = vmatprep.subr.mxu0 0.0
  %503 = vmatpush1.msra.mxu0 %v33
  %504 = vmatprep.subr.mxu0 0.0
  %505 = vmatpush1.msra.mxu0 0.0
  %506 = vmatprep.subr.mxu0 0.0
  %507 = vmatpush1.msra.mxu0 0.0
  %508 = vmatprep.subr.mxu0 0.0
  %509 = vmatpush1.msra.mxu0 0.0
  %510 = vmatprep.subr.mxu0 0.0
  %511 = vmatpush1.msra.mxu0 0.0
  %512 = vmatprep.subr.mxu0 0.0
  %513 = vmatpush1.msra.mxu0 0.0
  %514 = vmatprep.subr.mxu0 0.0
  %515 = vmatpush1.msra.mxu0 0.0
  %516 = vmatprep.subr.mxu0 0.0
  %517 = vmatpush1.msra.mxu0 0.0
  %518 = vmatprep.subr.mxu0 0.0
  %519 = vmatpush1.msra.mxu0 0.0
  %520 = vmatprep.subr.mxu0 0.0
  %521 = vmatpush1.msra.mxu0 0.0
  %522 = vmatprep.subr.mxu0 0.0
  %523 = vmatpush1.msra.mxu0 0.0
  %524 = vmatprep.subr.mxu0 0.0
  %525 = vmatpush1.msra.mxu0 0.0
  %526 = vmatprep.subr.mxu0 0.0
  %527 = vmatpush1.msra.mxu0 0.0
  %528 = vmatprep.subr.mxu0 0.0
  %529 = vmatpush1.msra.mxu0 0.0
  %530 = vmatprep.subr.mxu0 0.0
  %531 = vmatpush1.msra.mxu0 0.0
  %532 = vmatprep.subr.mxu0 0.0
  %533 = vmatpush1.msra.mxu0 0.0
  %534 = vmatprep.subr.mxu0 0.0
  %535 = vmatpush1.msra.mxu0 0.0
  %536 = vmatprep.subr.mxu0 0.0
  %537 = vmatpush1.msra.mxu0 0.0
  %538 = vmatprep.subr.mxu0 0.0
  %539 = vmatpush1.msra.mxu0 0.0
  %540 = vmatprep.subr.mxu0 0.0
  %541 = vmatpush1.msra.mxu0 0.0
  %542 = vmatprep.subr.mxu0 0.0
  %543 = vmatpush1.msra.mxu0 0.0
  %544 = vmatprep.subr.mxu0 0.0
  %545 = vmatpush1.msra.mxu0 0.0
  %546 = vmatprep.subr.mxu0 0.0
  %547 = vmatpush1.msra.mxu0 0.0
  %548 = vmatprep.subr.mxu0 0.0
  %549 = vmatpush1.msra.mxu0 0.0
  %550 = vmatprep.subr.mxu0 0.0
  %551 = vmatpush1.msra.mxu0 0.0
  %552 = vmatprep.subr.mxu0 0.0
  %553 = vmatpush1.msra.mxu0 0.0
  %554 = vmatprep.subr.mxu0 0.0
  %555 = vmatpush1.msra.mxu0 0.0
  %556 = vmatprep.subr.mxu0 0.0
  %557 = vmatpush1.msra.mxu0 0.0
  %558 = vmatprep.subr.mxu0 0.0
  %559 = vmatpush1.msra.mxu0 0.0
  %560 = vmatprep.mubr.f32.mxu0 0.0
  %561 = vmatmul.mubr.f32.gmra.mrb[0].mxu0 %v494
  %v562 = vpop.f32.mrb[0].mxu0
  %v563 = vadd.f32 %v39, %v562
  %v564 = vpop.f32.mrb[0].mxu0
  %565 = vdwg.mxu0
  %566 = vst [vmem:[%s6 + $0x10] sm:$0xff] %v563
  %v567 = vld [vmem:[%s0 + $0x18] sm:$0xff]
  %568 = vmatprep.subr.mxu0 0.0
  %569 = vmatpush1.msra.mxu0 %v26
  %570 = vmatprep.subr.mxu0 0.0
  %571 = vmatpush1.msra.mxu0 %v27
  %572 = vmatprep.subr.mxu0 0.0
  %573 = vmatpush1.msra.mxu0 %v28
  %574 = vmatprep.subr.mxu0 0.0
  %575 = vmatpush1.msra.mxu0 %v29
  %576 = vmatprep.subr.mxu0 0.0
  %577 = vmatpush1.msra.mxu0 0.0
  %578 = vmatprep.subr.mxu0 0.0
  %579 = vmatpush1.msra.mxu0 0.0
  %580 = vmatprep.subr.mxu0 0.0
  %581 = vmatpush1.msra.mxu0 0.0
  %582 = vmatprep.subr.mxu0 0.0
  %583 = vmatpush1.msra.mxu0 0.0
  %584 = vmatprep.subr.mxu0 0.0
  %585 = vmatpush1.msra.mxu0 0.0
  %586 = vmatprep.subr.mxu0 0.0
  %587 = vmatpush1.msra.mxu0 0.0
  %588 = vmatprep.subr.mxu0 0.0
  %589 = vmatpush1.msra.mxu0 0.0
  %590 = vmatprep.subr.mxu0 0.0
  %591 = vmatpush1.msra.mxu0 0.0
  %592 = vmatprep.subr.mxu0 0.0
  %593 = vmatpush1.msra.mxu0 0.0
  %594 = vmatprep.subr.mxu0 0.0
  %595 = vmatpush1.msra.mxu0 0.0
  %596 = vmatprep.subr.mxu0 0.0
  %597 = vmatpush1.msra.mxu0 0.0
  %598 = vmatprep.subr.mxu0 0.0
  %599 = vmatpush1.msra.mxu0 0.0
  %600 = vmatprep.subr.mxu0 0.0
  %601 = vmatpush1.msra.mxu0 0.0
  %602 = vmatprep.subr.mxu0 0.0
  %603 = vmatpush1.msra.mxu0 0.0
  %604 = vmatprep.subr.mxu0 0.0
  %605 = vmatpush1.msra.mxu0 0.0
  %606 = vmatprep.subr.mxu0 0.0
  %607 = vmatpush1.msra.mxu0 0.0
  %608 = vmatprep.subr.mxu0 0.0
  %609 = vmatpush1.msra.mxu0 0.0
  %610 = vmatprep.subr.mxu0 0.0
  %611 = vmatpush1.msra.mxu0 0.0
  %612 = vmatprep.subr.mxu0 0.0
  %613 = vmatpush1.msra.mxu0 0.0
  %614 = vmatprep.subr.mxu0 0.0
  %615 = vmatpush1.msra.mxu0 0.0
  %616 = vmatprep.subr.mxu0 0.0
  %617 = vmatpush1.msra.mxu0 0.0
  %618 = vmatprep.subr.mxu0 0.0
  %619 = vmatpush1.msra.mxu0 0.0
  %620 = vmatprep.subr.mxu0 0.0
  %621 = vmatpush1.msra.mxu0 0.0
  %622 = vmatprep.subr.mxu0 0.0
  %623 = vmatpush1.msra.mxu0 0.0
  %624 = vmatprep.subr.mxu0 0.0
  %625 = vmatpush1.msra.mxu0 0.0
  %626 = vmatprep.subr.mxu0 0.0
  %627 = vmatpush1.msra.mxu0 0.0
  %628 = vmatprep.subr.mxu0 0.0
  %629 = vmatpush1.msra.mxu0 0.0
  %630 = vmatprep.subr.mxu0 0.0
  %631 = vmatpush1.msra.mxu0 0.0
  %632 = vmatprep.mubr.f32.mxu0 0.0
  %633 = vmatmul.mubr.f32.gmra.mrb[0].mxu0 %v494
  %v634 = vpop.f32.mrb[0].mxu0
  %v635 = vadd.f32 0.0, %v634
  %v636 = vpop.f32.mrb[0].mxu0
  %637 = vdwg.mxu0
  %v638 = vadd.f32 %v567, %v635
  %v639 = vxor.u32 %v638, 2147483648
  %v640 = vmul.f32 %v639, 1.442695
  %v641 = vpow.pop %v640
  %v642 = vadd.f32 %v641, 1.0
  %v643 = vrcp.pop %v642
  %v644 = vmul.f32 1.0, %v643
  %v645 = vtanh.pop %v638
  %v646 = vmul.f32 %v644, %v484
  %648 = vrot.lane.b32.xlu0 %v645, 64
  %v649 = vpop.permute.xlu0 %648
  %v651 = vmul.f32 %v644, %v649
  %653 = vrot.lane.b32.xlu0 %v651, 32
  %v654 = vpop.permute.xlu0 %653
  %v656 = vadd.f32 %v646, %v654
  %v657 = vtanh.pop %v656
  %659 = vrot.lane.b32.xlu0 %v657, 64
  %v660 = vpop.permute.xlu0 %659
  %v662 = vmul.f32 %v644, %v660
  %664 = vrot.lane.b32.xlu0 %v662, 32
  %v665 = vpop.permute.xlu0 %664
  %v666 = vsel %vm44, %v665, 0
  %668 = vmatprep.subr.mxu0 0.0
  %669 = vmatpush1.msra.mxu0 %v30
  %670 = vmatprep.subr.mxu0 0.0
  %671 = vmatpush1.msra.mxu0 %v31
  %672 = vmatprep.subr.mxu0 0.0
  %673 = vmatpush1.msra.mxu0 %v32
  %674 = vmatprep.subr.mxu0 0.0
  %675 = vmatpush1.msra.mxu0 %v33
  %676 = vmatprep.subr.mxu0 0.0
  %677 = vmatpush1.msra.mxu0 0.0
  %678 = vmatprep.subr.mxu0 0.0
  %679 = vmatpush1.msra.mxu0 0.0
  %680 = vmatprep.subr.mxu0 0.0
  %681 = vmatpush1.msra.mxu0 0.0
  %682 = vmatprep.subr.mxu0 0.0
  %683 = vmatpush1.msra.mxu0 0.0
  %684 = vmatprep.subr.mxu0 0.0
  %685 = vmatpush1.msra.mxu0 0.0
  %686 = vmatprep.subr.mxu0 0.0
  %687 = vmatpush1.msra.mxu0 0.0
  %688 = vmatprep.subr.mxu0 0.0
  %689 = vmatpush1.msra.mxu0 0.0
  %690 = vmatprep.subr.mxu0 0.0
  %691 = vmatpush1.msra.mxu0 0.0
  %692 = vmatprep.subr.mxu0 0.0
  %693 = vmatpush1.msra.mxu0 0.0
  %694 = vmatprep.subr.mxu0 0.0
  %695 = vmatpush1.msra.mxu0 0.0
  %696 = vmatprep.subr.mxu0 0.0
  %697 = vmatpush1.msra.mxu0 0.0
  %698 = vmatprep.subr.mxu0 0.0
  %699 = vmatpush1.msra.mxu0 0.0
  %700 = vmatprep.subr.mxu0 0.0
  %701 = vmatpush1.msra.mxu0 0.0
  %702 = vmatprep.subr.mxu0 0.0
  %703 = vmatpush1.msra.mxu0 0.0
  %704 = vmatprep.subr.mxu0 0.0
  %705 = vmatpush1.msra.mxu0 0.0
  %706 = vmatprep.subr.mxu0 0.0
  %707 = vmatpush1.msra.mxu0 0.0
  %708 = vmatprep.subr.mxu0 0.0
  %709 = vmatpush1.msra.mxu0 0.0
  %710 = vmatprep.subr.mxu0 0.0
  %711 = vmatpush1.msra.mxu0 0.0
  %712 = vmatprep.subr.mxu0 0.0
  %713 = vmatpush1.msra.mxu0 0.0
  %714 = vmatprep.subr.mxu0 0.0
  %715 = vmatpush1.msra.mxu0 0.0
  %716 = vmatprep.subr.mxu0 0.0
  %717 = vmatpush1.msra.mxu0 0.0
  %718 = vmatprep.subr.mxu0 0.0
  %719 = vmatpush1.msra.mxu0 0.0
  %720 = vmatprep.subr.mxu0 0.0
  %721 = vmatpush1.msra.mxu0 0.0
  %722 = vmatprep.subr.mxu0 0.0
  %723 = vmatpush1.msra.mxu0 0.0
  %724 = vmatprep.subr.mxu0 0.0
  %725 = vmatpush1.msra.mxu0 0.0
  %726 = vmatprep.subr.mxu0 0.0
  %727 = vmatpush1.msra.mxu0 0.0
  %728 = vmatprep.subr.mxu0 0.0
  %729 = vmatpush1.msra.mxu0 0.0
  %730 = vmatprep.subr.mxu0 0.0
  %731 = vmatpush1.msra.mxu0 0.0
  %732 = vmatprep.mubr.f32.mxu0 0.0
  %733 = vmatmul.mubr.f32.gmra.mrb[0].mxu0 %v666
  %v734 = vpop.f32.mrb[0].mxu0
  %v735 = vadd.f32 %v39, %v734
  %v736 = vpop.f32.mrb[0].mxu0
  %737 = vdwg.mxu0
  %738 = vst [vmem:[%s6 + $0x18] sm:$0xff] %v735
  %v739 = vld [vmem:[%s0 + $0x20] sm:$0xff]
  %740 = vmatprep.subr.mxu0 0.0
  %741 = vmatpush1.msra.mxu0 %v26
  %742 = vmatprep.subr.mxu0 0.0
  %743 = vmatpush1.msra.mxu0 %v27
  %744 = vmatprep.subr.mxu0 0.0
  %745 = vmatpush1.msra.mxu0 %v28
  %746 = vmatprep.subr.mxu0 0.0
  %747 = vmatpush1.msra.mxu0 %v29
  %748 = vmatprep.subr.mxu0 0.0
  %749 = vmatpush1.msra.mxu0 0.0
  %750 = vmatprep.subr.mxu0 0.0
  %751 = vmatpush1.msra.mxu0 0.0
  %752 = vmatprep.subr.mxu0 0.0
  %753 = vmatpush1.msra.mxu0 0.0
  %754 = vmatprep.subr.mxu0 0.0
  %755 = vmatpush1.msra.mxu0 0.0
  %756 = vmatprep.subr.mxu0 0.0
  %757 = vmatpush1.msra.mxu0 0.0
  %758 = vmatprep.subr.mxu0 0.0
  %759 = vmatpush1.msra.mxu0 0.0
  %760 = vmatprep.subr.mxu0 0.0
  %761 = vmatpush1.msra.mxu0 0.0
  %762 = vmatprep.subr.mxu0 0.0
  %763 = vmatpush1.msra.mxu0 0.0
  %764 = vmatprep.subr.mxu0 0.0
  %765 = vmatpush1.msra.mxu0 0.0
  %766 = vmatprep.subr.mxu0 0.0
  %767 = vmatpush1.msra.mxu0 0.0
  %768 = vmatprep.subr.mxu0 0.0
  %769 = vmatpush1.msra.mxu0 0.0
  %770 = vmatprep.subr.mxu0 0.0
  %771 = vmatpush1.msra.mxu0 0.0
  %772 = vmatprep.subr.mxu0 0.0
  %773 = vmatpush1.msra.mxu0 0.0
  %774 = vmatprep.subr.mxu0 0.0
  %775 = vmatpush1.msra.mxu0 0.0
  %776 = vmatprep.subr.mxu0 0.0
  %777 = vmatpush1.msra.mxu0 0.0
  %778 = vmatprep.subr.mxu0 0.0
  %779 = vmatpush1.msra.mxu0 0.0
  %780 = vmatprep.subr.mxu0 0.0
  %781 = vmatpush1.msra.mxu0 0.0
  %782 = vmatprep.subr.mxu0 0.0
  %783 = vmatpush1.msra.mxu0 0.0
  %784 = vmatprep.subr.mxu0 0.0
  %785 = vmatpush1.msra.mxu0 0.0
  %786 = vmatprep.subr.mxu0 0.0
  %787 = vmatpush1.msra.mxu0 0.0
  %788 = vmatprep.subr.mxu0 0.0
  %789 = vmatpush1.msra.mxu0 0.0
  %790 = vmatprep.subr.mxu0 0.0
  %791 = vmatpush1.msra.mxu0 0.0
  %792 = vmatprep.subr.mxu0 0.0
  %793 = vmatpush1.msra.mxu0 0.0
  %794 = vmatprep.subr.mxu0 0.0
  %795 = vmatpush1.msra.mxu0 0.0
  %796 = vmatprep.subr.mxu0 0.0
  %797 = vmatpush1.msra.mxu0 0.0
  %798 = vmatprep.subr.mxu0 0.0
  %799 = vmatpush1.msra.mxu0 0.0
  %800 = vmatprep.subr.mxu0 0.0
  %801 = vmatpush1.msra.mxu0 0.0
  %802 = vmatprep.subr.mxu0 0.0
  %803 = vmatpush1.msra.mxu0 0.0
  %804 = vmatprep.mubr.f32.mxu0 0.0
  %805 = vmatmul.mubr.f32.gmra.mrb[0].mxu0 %v666
  %v806 = vpop.f32.mrb[0].mxu0
  %v807 = vadd.f32 0.0, %v806
  %v808 = vpop.f32.mrb[0].mxu0
  %809 = vdwg.mxu0
  %v810 = vadd.f32 %v739, %v807
  %v811 = vxor.u32 %v810, 2147483648
  %v812 = vmul.f32 %v811, 1.442695
  %v813 = vpow.pop %v812
  %v814 = vadd.f32 %v813, 1.0
  %v815 = vrcp.pop %v814
  %v816 = vmul.f32 1.0, %v815
  %v817 = vtanh.pop %v810
  %v818 = vmul.f32 %v816, %v656
  %820 = vrot.lane.b32.xlu0 %v817, 64
  %v821 = vpop.permute.xlu0 %820
  %v823 = vmul.f32 %v816, %v821
  %825 = vrot.lane.b32.xlu0 %v823, 32
  %v826 = vpop.permute.xlu0 %825
  %v828 = vadd.f32 %v818, %v826
  %v829 = vtanh.pop %v828
  %831 = vrot.lane.b32.xlu0 %v829, 64
  %v832 = vpop.permute.xlu0 %831
  %v834 = vmul.f32 %v816, %v832
  %836 = vrot.lane.b32.xlu0 %v834, 32
  %v837 = vpop.permute.xlu0 %836
  %v838 = vsel %vm44, %v837, 0
  %840 = vmatprep.subr.mxu0 0.0
  %841 = vmatpush1.msra.mxu0 %v30
  %842 = vmatprep.subr.mxu0 0.0
  %843 = vmatpush1.msra.mxu0 %v31
  %844 = vmatprep.subr.mxu0 0.0
  %845 = vmatpush1.msra.mxu0 %v32
  %846 = vmatprep.subr.mxu0 0.0
  %847 = vmatpush1.msra.mxu0 %v33
  %848 = vmatprep.subr.mxu0 0.0
  %849 = vmatpush1.msra.mxu0 0.0
  %850 = vmatprep.subr.mxu0 0.0
  %851 = vmatpush1.msra.mxu0 0.0
  %852 = vmatprep.subr.mxu0 0.0
  %853 = vmatpush1.msra.mxu0 0.0
  %854 = vmatprep.subr.mxu0 0.0
  %855 = vmatpush1.msra.mxu0 0.0
  %856 = vmatprep.subr.mxu0 0.0
  %857 = vmatpush1.msra.mxu0 0.0
  %858 = vmatprep.subr.mxu0 0.0
  %859 = vmatpush1.msra.mxu0 0.0
  %860 = vmatprep.subr.mxu0 0.0
  %861 = vmatpush1.msra.mxu0 0.0
  %862 = vmatprep.subr.mxu0 0.0
  %863 = vmatpush1.msra.mxu0 0.0
  %864 = vmatprep.subr.mxu0 0.0
  %865 = vmatpush1.msra.mxu0 0.0
  %866 = vmatprep.subr.mxu0 0.0
  %867 = vmatpush1.msra.mxu0 0.0
  %868 = vmatprep.subr.mxu0 0.0
  %869 = vmatpush1.msra.mxu0 0.0
  %870 = vmatprep.subr.mxu0 0.0
  %871 = vmatpush1.msra.mxu0 0.0
  %872 = vmatprep.subr.mxu0 0.0
  %873 = vmatpush1.msra.mxu0 0.0
  %874 = vmatprep.subr.mxu0 0.0
  %875 = vmatpush1.msra.mxu0 0.0
  %876 = vmatprep.subr.mxu0 0.0
  %877 = vmatpush1.msra.mxu0 0.0
  %878 = vmatprep.subr.mxu0 0.0
  %879 = vmatpush1.msra.mxu0 0.0
  %880 = vmatprep.subr.mxu0 0.0
  %881 = vmatpush1.msra.mxu0 0.0
  %882 = vmatprep.subr.mxu0 0.0
  %883 = vmatpush1.msra.mxu0 0.0
  %884 = vmatprep.subr.mxu0 0.0
  %885 = vmatpush1.msra.mxu0 0.0
  %886 = vmatprep.subr.mxu0 0.0
  %887 = vmatpush1.msra.mxu0 0.0
  %888 = vmatprep.subr.mxu0 0.0
  %889 = vmatpush1.msra.mxu0 0.0
  %890 = vmatprep.subr.mxu0 0.0
  %891 = vmatpush1.msra.mxu0 0.0
  %892 = vmatprep.subr.mxu0 0.0
  %893 = vmatpush1.msra.mxu0 0.0
  %894 = vmatprep.subr.mxu0 0.0
  %895 = vmatpush1.msra.mxu0 0.0
  %896 = vmatprep.subr.mxu0 0.0
  %897 = vmatpush1.msra.mxu0 0.0
  %898 = vmatprep.subr.mxu0 0.0
  %899 = vmatpush1.msra.mxu0 0.0
  %900 = vmatprep.subr.mxu0 0.0
  %901 = vmatpush1.msra.mxu0 0.0
  %902 = vmatprep.subr.mxu0 0.0
  %903 = vmatpush1.msra.mxu0 0.0
  %904 = vmatprep.mubr.f32.mxu0 0.0
  %905 = vmatmul.mubr.f32.gmra.mrb[0].mxu0 %v838
  %v906 = vpop.f32.mrb[0].mxu0
  %v907 = vadd.f32 %v39, %v906
  %v908 = vpop.f32.mrb[0].mxu0
  %909 = vdwg.mxu0
  %910 = vst [vmem:[%s6 + $0x20] sm:$0xff] %v907
  %v911 = vld [vmem:[%s0 + $0x28] sm:$0xff]
  %912 = vmatprep.subr.mxu0 0.0
  %913 = vmatpush1.msra.mxu0 %v26
  %914 = vmatprep.subr.mxu0 0.0
  %915 = vmatpush1.msra.mxu0 %v27
  %916 = vmatprep.subr.mxu0 0.0
  %917 = vmatpush1.msra.mxu0 %v28
  %918 = vmatprep.subr.mxu0 0.0
  %919 = vmatpush1.msra.mxu0 %v29
  %920 = vmatprep.subr.mxu0 0.0
  %921 = vmatpush1.msra.mxu0 0.0
  %922 = vmatprep.subr.mxu0 0.0
  %923 = vmatpush1.msra.mxu0 0.0
  %924 = vmatprep.subr.mxu0 0.0
  %925 = vmatpush1.msra.mxu0 0.0
  %926 = vmatprep.subr.mxu0 0.0
  %927 = vmatpush1.msra.mxu0 0.0
  %928 = vmatprep.subr.mxu0 0.0
  %929 = vmatpush1.msra.mxu0 0.0
  %930 = vmatprep.subr.mxu0 0.0
  %931 = vmatpush1.msra.mxu0 0.0
  %932 = vmatprep.subr.mxu0 0.0
  %933 = vmatpush1.msra.mxu0 0.0
  %934 = vmatprep.subr.mxu0 0.0
  %935 = vmatpush1.msra.mxu0 0.0
  %936 = vmatprep.subr.mxu0 0.0
  %937 = vmatpush1.msra.mxu0 0.0
  %938 = vmatprep.subr.mxu0 0.0
  %939 = vmatpush1.msra.mxu0 0.0
  %940 = vmatprep.subr.mxu0 0.0
  %941 = vmatpush1.msra.mxu0 0.0
  %942 = vmatprep.subr.mxu0 0.0
  %943 = vmatpush1.msra.mxu0 0.0
  %944 = vmatprep.subr.mxu0 0.0
  %945 = vmatpush1.msra.mxu0 0.0
  %946 = vmatprep.subr.mxu0 0.0
  %947 = vmatpush1.msra.mxu0 0.0
  %948 = vmatprep.subr.mxu0 0.0
  %949 = vmatpush1.msra.mxu0 0.0
  %950 = vmatprep.subr.mxu0 0.0
  %951 = vmatpush1.msra.mxu0 0.0
  %952 = vmatprep.subr.mxu0 0.0
  %953 = vmatpush1.msra.mxu0 0.0
  %954 = vmatprep.subr.mxu0 0.0
  %955 = vmatpush1.msra.mxu0 0.0
  %956 = vmatprep.subr.mxu0 0.0
  %957 = vmatpush1.msra.mxu0 0.0
  %958 = vmatprep.subr.mxu0 0.0
  %959 = vmatpush1.msra.mxu0 0.0
  %960 = vmatprep.subr.mxu0 0.0
  %961 = vmatpush1.msra.mxu0 0.0
  %962 = vmatprep.subr.mxu0 0.0
  %963 = vmatpush1.msra.mxu0 0.0
  %964 = vmatprep.subr.mxu0 0.0
  %965 = vmatpush1.msra.mxu0 0.0
  %966 = vmatprep.subr.mxu0 0.0
  %967 = vmatpush1.msra.mxu0 0.0
  %968 = vmatprep.subr.mxu0 0.0
  %969 = vmatpush1.msra.mxu0 0.0
  %970 = vmatprep.subr.mxu0 0.0
  %971 = vmatpush1.msra.mxu0 0.0
  %972 = vmatprep.subr.mxu0 0.0
  %973 = vmatpush1.msra.mxu0 0.0
  %974 = vmatprep.subr.mxu0 0.0
  %975 = vmatpush1.msra.mxu0 0.0
  %976 = vmatprep.mubr.f32.mxu0 0.0
  %977 = vmatmul.mubr.f32.gmra.mrb[0].mxu0 %v838
  %v978 = vpop.f32.mrb[0].mxu0
  %v979 = vadd.f32 0.0, %v978
  %v980 = vpop.f32.mrb[0].mxu0
  %981 = vdwg.mxu0
  %v982 = vadd.f32 %v911, %v979
  %v983 = vxor.u32 %v982, 2147483648
  %v984 = vmul.f32 %v983, 1.442695
  %v985 = vpow.pop %v984
  %v986 = vadd.f32 %v985, 1.0
  %v987 = vrcp.pop %v986
  %v988 = vmul.f32 1.0, %v987
  %v989 = vtanh.pop %v982
  %v990 = vmul.f32 %v988, %v828
  %992 = vrot.lane.b32.xlu0 %v989, 64
  %v993 = vpop.permute.xlu0 %992
  %v995 = vmul.f32 %v988, %v993
  %997 = vrot.lane.b32.xlu0 %v995, 32
  %v998 = vpop.permute.xlu0 %997
  %v1000 = vadd.f32 %v990, %v998
  %v1001 = vtanh.pop %v1000
  %1003 = vrot.lane.b32.xlu0 %v1001, 64
  %v1004 = vpop.permute.xlu0 %1003
  %v1006 = vmul.f32 %v988, %v1004
  %1008 = vrot.lane.b32.xlu0 %v1006, 32
  %v1009 = vpop.permute.xlu0 %1008
  %v1010 = vsel %vm44, %v1009, 0
  %1012 = vmatprep.subr.mxu0 0.0
  %1013 = vmatpush1.msra.mxu0 %v30
  %1014 = vmatprep.subr.mxu0 0.0
  %1015 = vmatpush1.msra.mxu0 %v31
  %1016 = vmatprep.subr.mxu0 0.0
  %1017 = vmatpush1.msra.mxu0 %v32
  %1018 = vmatprep.subr.mxu0 0.0
  %1019 = vmatpush1.msra.mxu0 %v33
  %1020 = vmatprep.subr.mxu0 0.0
  %1021 = vmatpush1.msra.mxu0 0.0
  %1022 = vmatprep.subr.mxu0 0.0
  %1023 = vmatpush1.msra.mxu0 0.0
  %1024 = vmatprep.subr.mxu0 0.0
  %1025 = vmatpush1.msra.mxu0 0.0
  %1026 = vmatprep.subr.mxu0 0.0
  %1027 = vmatpush1.msra.mxu0 0.0
  %1028 = vmatprep.subr.mxu0 0.0
  %1029 = vmatpush1.msra.mxu0 0.0
  %1030 = vmatprep.subr.mxu0 0.0
  %1031 = vmatpush1.msra.mxu0 0.0
  %1032 = vmatprep.subr.mxu0 0.0
  %1033 = vmatpush1.msra.mxu0 0.0
  %1034 = vmatprep.subr.mxu0 0.0
  %1035 = vmatpush1.msra.mxu0 0.0
  %1036 = vmatprep.subr.mxu0 0.0
  %1037 = vmatpush1.msra.mxu0 0.0
  %1038 = vmatprep.subr.mxu0 0.0
  %1039 = vmatpush1.msra.mxu0 0.0
  %1040 = vmatprep.subr.mxu0 0.0
  %1041 = vmatpush1.msra.mxu0 0.0
  %1042 = vmatprep.subr.mxu0 0.0
  %1043 = vmatpush1.msra.mxu0 0.0
  %1044 = vmatprep.subr.mxu0 0.0
  %1045 = vmatpush1.msra.mxu0 0.0
  %1046 = vmatprep.subr.mxu0 0.0
  %1047 = vmatpush1.msra.mxu0 0.0
  %1048 = vmatprep.subr.mxu0 0.0
  %1049 = vmatpush1.msra.mxu0 0.0
  %1050 = vmatprep.subr.mxu0 0.0
  %1051 = vmatpush1.msra.mxu0 0.0
  %1052 = vmatprep.subr.mxu0 0.0
  %1053 = vmatpush1.msra.mxu0 0.0
  %1054 = vmatprep.subr.mxu0 0.0
  %1055 = vmatpush1.msra.mxu0 0.0
  %1056 = vmatprep.subr.mxu0 0.0
  %1057 = vmatpush1.msra.mxu0 0.0
  %1058 = vmatprep.subr.mxu0 0.0
  %1059 = vmatpush1.msra.mxu0 0.0
  %1060 = vmatprep.subr.mxu0 0.0
  %1061 = vmatpush1.msra.mxu0 0.0
  %1062 = vmatprep.subr.mxu0 0.0
  %1063 = vmatpush1.msra.mxu0 0.0
  %1064 = vmatprep.subr.mxu0 0.0
  %1065 = vmatpush1.msra.mxu0 0.0
  %1066 = vmatprep.subr.mxu0 0.0
  %1067 = vmatpush1.msra.mxu0 0.0
  %1068 = vmatprep.subr.mxu0 0.0
  %1069 = vmatpush1.msra.mxu0 0.0
  %1070 = vmatprep.subr.mxu0 0.0
  %1071 = vmatpush1.msra.mxu0 0.0
  %1072 = vmatprep.subr.mxu0 0.0
  %1073 = vmatpush1.msra.mxu0 0.0
  %1074 = vmatprep.subr.mxu0 0.0
  %1075 = vmatpush1.msra.mxu0 0.0
  %1076 = vmatprep.mubr.f32.mxu0 0.0
  %1077 = vmatmul.mubr.f32.gmra.mrb[0].mxu0 %v1010
  %v1078 = vpop.f32.mrb[0].mxu0
  %v1079 = vadd.f32 %v39, %v1078
  %v1080 = vpop.f32.mrb[0].mxu0
  %1081 = vdwg.mxu0
  %1082 = vst [vmem:[%s6 + $0x28] sm:$0xff] %v1079
  %v1083 = vld [vmem:[%s0 + $0x30] sm:$0xff]
  %1084 = vmatprep.subr.mxu0 0.0
  %1085 = vmatpush1.msra.mxu0 %v26
  %1086 = vmatprep.subr.mxu0 0.0
  %1087 = vmatpush1.msra.mxu0 %v27
  %1088 = vmatprep.subr.mxu0 0.0
  %1089 = vmatpush1.msra.mxu0 %v28
  %1090 = vmatprep.subr.mxu0 0.0
  %1091 = vmatpush1.msra.mxu0 %v29
  %1092 = vmatprep.subr.mxu0 0.0
  %1093 = vmatpush1.msra.mxu0 0.0
  %1094 = vmatprep.subr.mxu0 0.0
  %1095 = vmatpush1.msra.mxu0 0.0
  %1096 = vmatprep.subr.mxu0 0.0
  %1097 = vmatpush1.msra.mxu0 0.0
  %1098 = vmatprep.subr.mxu0 0.0
  %1099 = vmatpush1.msra.mxu0 0.0
  %1100 = vmatprep.subr.mxu0 0.0
  %1101 = vmatpush1.msra.mxu0 0.0
  %1102 = vmatprep.subr.mxu0 0.0
  %1103 = vmatpush1.msra.mxu0 0.0
  %1104 = vmatprep.subr.mxu0 0.0
  %1105 = vmatpush1.msra.mxu0 0.0
  %1106 = vmatprep.subr.mxu0 0.0
  %1107 = vmatpush1.msra.mxu0 0.0
  %1108 = vmatprep.subr.mxu0 0.0
  %1109 = vmatpush1.msra.mxu0 0.0
  %1110 = vmatprep.subr.mxu0 0.0
  %1111 = vmatpush1.msra.mxu0 0.0
  %1112 = vmatprep.subr.mxu0 0.0
  %1113 = vmatpush1.msra.mxu0 0.0
  %1114 = vmatprep.subr.mxu0 0.0
  %1115 = vmatpush1.msra.mxu0 0.0
  %1116 = vmatprep.subr.mxu0 0.0
  %1117 = vmatpush1.msra.mxu0 0.0
  %1118 = vmatprep.subr.mxu0 0.0
  %1119 = vmatpush1.msra.mxu0 0.0
  %1120 = vmatprep.subr.mxu0 0.0
  %1121 = vmatpush1.msra.mxu0 0.0
  %1122 = vmatprep.subr.mxu0 0.0
  %1123 = vmatpush1.msra.mxu0 0.0
  %1124 = vmatprep.subr.mxu0 0.0
  %1125 = vmatpush1.msra.mxu0 0.0
  %1126 = vmatprep.subr.mxu0 0.0
  %1127 = vmatpush1.msra.mxu0 0.0
  %1128 = vmatprep.subr.mxu0 0.0
  %1129 = vmatpush1.msra.mxu0 0.0
  %1130 = vmatprep.subr.mxu0 0.0
  %1131 = vmatpush1.msra.mxu0 0.0
  %1132 = vmatprep.subr.mxu0 0.0
  %1133 = vmatpush1.msra.mxu0 0.0
  %1134 = vmatprep.subr.mxu0 0.0
  %1135 = vmatpush1.msra.mxu0 0.0
  %1136 = vmatprep.subr.mxu0 0.0
  %1137 = vmatpush1.msra.mxu0 0.0
  %1138 = vmatprep.subr.mxu0 0.0
  %1139 = vmatpush1.msra.mxu0 0.0
  %1140 = vmatprep.subr.mxu0 0.0
  %1141 = vmatpush1.msra.mxu0 0.0
  %1142 = vmatprep.subr.mxu0 0.0
  %1143 = vmatpush1.msra.mxu0 0.0
  %1144 = vmatprep.subr.mxu0 0.0
  %1145 = vmatpush1.msra.mxu0 0.0
  %1146 = vmatprep.subr.mxu0 0.0
  %1147 = vmatpush1.msra.mxu0 0.0
  %1148 = vmatprep.mubr.f32.mxu0 0.0
  %1149 = vmatmul.mubr.f32.gmra.mrb[0].mxu0 %v1010
  %v1150 = vpop.f32.mrb[0].mxu0
  %v1151 = vadd.f32 0.0, %v1150
  %v1152 = vpop.f32.mrb[0].mxu0
  %1153 = vdwg.mxu0
  %v1154 = vadd.f32 %v1083, %v1151
  %v1155 = vxor.u32 %v1154, 2147483648
  %v1156 = vmul.f32 %v1155, 1.442695
  %v1157 = vpow.pop %v1156
  %v1158 = vadd.f32 %v1157, 1.0
  %v1159 = vrcp.pop %v1158
  %v1160 = vmul.f32 1.0, %v1159
  %v1161 = vtanh.pop %v1154
  %v1162 = vmul.f32 %v1160, %v1000
  %1164 = vrot.lane.b32.xlu0 %v1161, 64
  %v1165 = vpop.permute.xlu0 %1164
  %v1167 = vmul.f32 %v1160, %v1165
  %1169 = vrot.lane.b32.xlu0 %v1167, 32
  %v1170 = vpop.permute.xlu0 %1169
  %v1172 = vadd.f32 %v1162, %v1170
  %v1173 = vtanh.pop %v1172
  %1175 = vrot.lane.b32.xlu0 %v1173, 64
  %v1176 = vpop.permute.xlu0 %1175
  %v1178 = vmul.f32 %v1160, %v1176
  %1180 = vrot.lane.b32.xlu0 %v1178, 32
  %v1181 = vpop.permute.xlu0 %1180
  %v1182 = vsel %vm44, %v1181, 0
  %1184 = vmatprep.subr.mxu0 0.0
  %1185 = vmatpush1.msra.mxu0 %v30
  %1186 = vmatprep.subr.mxu0 0.0
  %1187 = vmatpush1.msra.mxu0 %v31
  %1188 = vmatprep.subr.mxu0 0.0
  %1189 = vmatpush1.msra.mxu0 %v32
  %1190 = vmatprep.subr.mxu0 0.0
  %1191 = vmatpush1.msra.mxu0 %v33
  %1192 = vmatprep.subr.mxu0 0.0
  %1193 = vmatpush1.msra.mxu0 0.0
  %1194 = vmatprep.subr.mxu0 0.0
  %1195 = vmatpush1.msra.mxu0 0.0
  %1196 = vmatprep.subr.mxu0 0.0
  %1197 = vmatpush1.msra.mxu0 0.0
  %1198 = vmatprep.subr.mxu0 0.0
  %1199 = vmatpush1.msra.mxu0 0.0
  %1200 = vmatprep.subr.mxu0 0.0
  %1201 = vmatpush1.msra.mxu0 0.0
  %1202 = vmatprep.subr.mxu0 0.0
  %1203 = vmatpush1.msra.mxu0 0.0
  %1204 = vmatprep.subr.mxu0 0.0
  %1205 = vmatpush1.msra.mxu0 0.0
  %1206 = vmatprep.subr.mxu0 0.0
  %1207 = vmatpush1.msra.mxu0 0.0
  %1208 = vmatprep.subr.mxu0 0.0
  %1209 = vmatpush1.msra.mxu0 0.0
  %1210 = vmatprep.subr.mxu0 0.0
  %1211 = vmatpush1.msra.mxu0 0.0
  %1212 = vmatprep.subr.mxu0 0.0
  %1213 = vmatpush1.msra.mxu0 0.0
  %1214 = vmatprep.subr.mxu0 0.0
  %1215 = vmatpush1.msra.mxu0 0.0
  %1216 = vmatprep.subr.mxu0 0.0
  %1217 = vmatpush1.msra.mxu0 0.0
  %1218 = vmatprep.subr.mxu0 0.0
  %1219 = vmatpush1.msra.mxu0 0.0
  %1220 = vmatprep.subr.mxu0 0.0
  %1221 = vmatpush1.msra.mxu0 0.0
  %1222 = vmatprep.subr.mxu0 0.0
  %1223 = vmatpush1.msra.mxu0 0.0
  %1224 = vmatprep.subr.mxu0 0.0
  %1225 = vmatpush1.msra.mxu0 0.0
  %1226 = vmatprep.subr.mxu0 0.0
  %1227 = vmatpush1.msra.mxu0 0.0
  %1228 = vmatprep.subr.mxu0 0.0
  %1229 = vmatpush1.msra.mxu0 0.0
  %1230 = vmatprep.subr.mxu0 0.0
  %1231 = vmatpush1.msra.mxu0 0.0
  %1232 = vmatprep.subr.mxu0 0.0
  %1233 = vmatpush1.msra.mxu0 0.0
  %1234 = vmatprep.subr.mxu0 0.0
  %1235 = vmatpush1.msra.mxu0 0.0
  %1236 = vmatprep.subr.mxu0 0.0
  %1237 = vmatpush1.msra.mxu0 0.0
  %1238 = vmatprep.subr.mxu0 0.0
  %1239 = vmatpush1.msra.mxu0 0.0
  %1240 = vmatprep.subr.mxu0 0.0
  %1241 = vmatpush1.msra.mxu0 0.0
  %1242 = vmatprep.subr.mxu0 0.0
  %1243 = vmatpush1.msra.mxu0 0.0
  %1244 = vmatprep.subr.mxu0 0.0
  %1245 = vmatpush1.msra.mxu0 0.0
  %1246 = vmatprep.subr.mxu0 0.0
  %1247 = vmatpush1.msra.mxu0 0.0
  %1248 = vmatprep.mubr.f32.mxu0 0.0
  %1249 = vmatmul.mubr.f32.gmra.mrb[0].mxu0 %v1182
  %v1250 = vpop.f32.mrb[0].mxu0
  %v1251 = vadd.f32 %v39, %v1250
  %v1252 = vpop.f32.mrb[0].mxu0
  %1253 = vdwg.mxu0
  %1254 = vst [vmem:[%s6 + $0x30] sm:$0xff] %v1251
  %v1255 = vld [vmem:[%s0 + $0x38] sm:$0xff]
  %1256 = vmatprep.subr.mxu0 0.0
  %1257 = vmatpush1.msra.mxu0 %v26
  %1258 = vmatprep.subr.mxu0 0.0
  %1259 = vmatpush1.msra.mxu0 %v27
  %1260 = vmatprep.subr.mxu0 0.0
  %1261 = vmatpush1.msra.mxu0 %v28
  %1262 = vmatprep.subr.mxu0 0.0
  %1263 = vmatpush1.msra.mxu0 %v29
  %1264 = vmatprep.subr.mxu0 0.0
  %1265 = vmatpush1.msra.mxu0 0.0
  %1266 = vmatprep.subr.mxu0 0.0
  %1267 = vmatpush1.msra.mxu0 0.0
  %1268 = vmatprep.subr.mxu0 0.0
  %1269 = vmatpush1.msra.mxu0 0.0
  %1270 = vmatprep.subr.mxu0 0.0
  %1271 = vmatpush1.msra.mxu0 0.0
  %1272 = vmatprep.subr.mxu0 0.0
  %1273 = vmatpush1.msra.mxu0 0.0
  %1274 = vmatprep.subr.mxu0 0.0
  %1275 = vmatpush1.msra.mxu0 0.0
  %1276 = vmatprep.subr.mxu0 0.0
  %1277 = vmatpush1.msra.mxu0 0.0
  %1278 = vmatprep.subr.mxu0 0.0
  %1279 = vmatpush1.msra.mxu0 0.0
  %1280 = vmatprep.subr.mxu0 0.0
  %1281 = vmatpush1.msra.mxu0 0.0
  %1282 = vmatprep.subr.mxu0 0.0
  %1283 = vmatpush1.msra.mxu0 0.0
  %1284 = vmatprep.subr.mxu0 0.0
  %1285 = vmatpush1.msra.mxu0 0.0
  %1286 = vmatprep.subr.mxu0 0.0
  %1287 = vmatpush1.msra.mxu0 0.0
  %1288 = vmatprep.subr.mxu0 0.0
  %1289 = vmatpush1.msra.mxu0 0.0
  %1290 = vmatprep.subr.mxu0 0.0
  %1291 = vmatpush1.msra.mxu0 0.0
  %1292 = vmatprep.subr.mxu0 0.0
  %1293 = vmatpush1.msra.mxu0 0.0
  %1294 = vmatprep.subr.mxu0 0.0
  %1295 = vmatpush1.msra.mxu0 0.0
  %1296 = vmatprep.subr.mxu0 0.0
  %1297 = vmatpush1.msra.mxu0 0.0
  %1298 = vmatprep.subr.mxu0 0.0
  %1299 = vmatpush1.msra.mxu0 0.0
  %1300 = vmatprep.subr.mxu0 0.0
  %1301 = vmatpush1.msra.mxu0 0.0
  %1302 = vmatprep.subr.mxu0 0.0
  %1303 = vmatpush1.msra.mxu0 0.0
  %1304 = vmatprep.subr.mxu0 0.0
  %1305 = vmatpush1.msra.mxu0 0.0
  %1306 = vmatprep.subr.mxu0 0.0
  %1307 = vmatpush1.msra.mxu0 0.0
  %1308 = vmatprep.subr.mxu0 0.0
  %1309 = vmatpush1.msra.mxu0 0.0
  %1310 = vmatprep.subr.mxu0 0.0
  %1311 = vmatpush1.msra.mxu0 0.0
  %1312 = vmatprep.subr.mxu0 0.0
  %1313 = vmatpush1.msra.mxu0 0.0
  %1314 = vmatprep.subr.mxu0 0.0
  %1315 = vmatpush1.msra.mxu0 0.0
  %1316 = vmatprep.subr.mxu0 0.0
  %1317 = vmatpush1.msra.mxu0 0.0
  %1318 = vmatprep.subr.mxu0 0.0
  %1319 = vmatpush1.msra.mxu0 0.0
  %1320 = vmatprep.mubr.f32.mxu0 0.0
  %1321 = vmatmul.mubr.f32.gmra.mrb[0].mxu0 %v1182
  %v1322 = vpop.f32.mrb[0].mxu0
  %v1323 = vadd.f32 0.0, %v1322
  %v1324 = vpop.f32.mrb[0].mxu0
  %1325 = vdwg.mxu0
  %v1326 = vadd.f32 %v1255, %v1323
  %v1327 = vxor.u32 %v1326, 2147483648
  %v1328 = vmul.f32 %v1327, 1.442695
  %v1329 = vpow.pop %v1328
  %v1330 = vadd.f32 %v1329, 1.0
  %v1331 = vrcp.pop %v1330
  %v1332 = vmul.f32 1.0, %v1331
  %v1333 = vtanh.pop %v1326
  %v1334 = vmul.f32 %v1332, %v1172
  %1336 = vrot.lane.b32.xlu0 %v1333, 64
  %v1337 = vpop.permute.xlu0 %1336
  %v1339 = vmul.f32 %v1332, %v1337
  %1341 = vrot.lane.b32.xlu0 %v1339, 32
  %v1342 = vpop.permute.xlu0 %1341
  %v1344 = vadd.f32 %v1334, %v1342
  %v1345 = vtanh.pop %v1344
  %1347 = vrot.lane.b32.xlu0 %v1345, 64
  %v1348 = vpop.permute.xlu0 %1347
  %v1350 = vmul.f32 %v1332, %v1348
  %1352 = vrot.lane.b32.xlu0 %v1350, 32
  %v1353 = vpop.permute.xlu0 %1352
  %v1354 = vsel %vm44, %v1353, 0
  %1356 = vmatprep.subr.mxu0 0.0
  %1357 = vmatpush1.msra.mxu0 %v30
  %1358 = vmatprep.subr.mxu0 0.0
  %1359 = vmatpush1.msra.mxu0 %v31
  %1360 = vmatprep.subr.mxu0 0.0
  %1361 = vmatpush1.msra.mxu0 %v32
  %1362 = vmatprep.subr.mxu0 0.0
  %1363 = vmatpush1.msra.mxu0 %v33
  %1364 = vmatprep.subr.mxu0 0.0
  %1365 = vmatpush1.msra.mxu0 0.0
  %1366 = vmatprep.subr.mxu0 0.0
  %1367 = vmatpush1.msra.mxu0 0.0
  %1368 = vmatprep.subr.mxu0 0.0
  %1369 = vmatpush1.msra.mxu0 0.0
  %1370 = vmatprep.subr.mxu0 0.0
  %1371 = vmatpush1.msra.mxu0 0.0
  %1372 = vmatprep.subr.mxu0 0.0
  %1373 = vmatpush1.msra.mxu0 0.0
  %1374 = vmatprep.subr.mxu0 0.0
  %1375 = vmatpush1.msra.mxu0 0.0
  %1376 = vmatprep.subr.mxu0 0.0
  %1377 = vmatpush1.msra.mxu0 0.0
  %1378 = vmatprep.subr.mxu0 0.0
  %1379 = vmatpush1.msra.mxu0 0.0
  %1380 = vmatprep.subr.mxu0 0.0
  %1381 = vmatpush1.msra.mxu0 0.0
  %1382 = vmatprep.subr.mxu0 0.0
  %1383 = vmatpush1.msra.mxu0 0.0
  %1384 = vmatprep.subr.mxu0 0.0
  %1385 = vmatpush1.msra.mxu0 0.0
  %1386 = vmatprep.subr.mxu0 0.0
  %1387 = vmatpush1.msra.mxu0 0.0
  %1388 = vmatprep.subr.mxu0 0.0
  %1389 = vmatpush1.msra.mxu0 0.0
  %1390 = vmatprep.subr.mxu0 0.0
  %1391 = vmatpush1.msra.mxu0 0.0
  %1392 = vmatprep.subr.mxu0 0.0
  %1393 = vmatpush1.msra.mxu0 0.0
  %1394 = vmatprep.subr.mxu0 0.0
  %1395 = vmatpush1.msra.mxu0 0.0
  %1396 = vmatprep.subr.mxu0 0.0
  %1397 = vmatpush1.msra.mxu0 0.0
  %1398 = vmatprep.subr.mxu0 0.0
  %1399 = vmatpush1.msra.mxu0 0.0
  %1400 = vmatprep.subr.mxu0 0.0
  %1401 = vmatpush1.msra.mxu0 0.0
  %1402 = vmatprep.subr.mxu0 0.0
  %1403 = vmatpush1.msra.mxu0 0.0
  %1404 = vmatprep.subr.mxu0 0.0
  %1405 = vmatpush1.msra.mxu0 0.0
  %1406 = vmatprep.subr.mxu0 0.0
  %1407 = vmatpush1.msra.mxu0 0.0
  %1408 = vmatprep.subr.mxu0 0.0
  %1409 = vmatpush1.msra.mxu0 0.0
  %1410 = vmatprep.subr.mxu0 0.0
  %1411 = vmatpush1.msra.mxu0 0.0
  %1412 = vmatprep.subr.mxu0 0.0
  %1413 = vmatpush1.msra.mxu0 0.0
  %1414 = vmatprep.subr.mxu0 0.0
  %1415 = vmatpush1.msra.mxu0 0.0
  %1416 = vmatprep.subr.mxu0 0.0
  %1417 = vmatpush1.msra.mxu0 0.0
  %1418 = vmatprep.subr.mxu0 0.0
  %1419 = vmatpush1.msra.mxu0 0.0
  %1420 = vmatprep.mubr.f32.mxu0 0.0
  %1421 = vmatmul.mubr.f32.gmra.mrb[0].mxu0 %v1354
  %v1422 = vpop.f32.mrb[0].mxu0
  %v1423 = vadd.f32 %v39, %v1422
  %v1424 = vpop.f32.mrb[0].mxu0
  %1425 = vdwg.mxu0
  %1426 = vst [vmem:[%s6 + $0x38] sm:$0xff] %v1423
  %1428 = vst.msk [vmem:[%s7] sm:$0xff] %vm44, %v1353
  %1430 = vrot.lane.b32.xlu0 %v1344, 96
  %v1431 = vpop.permute.xlu0 %1430
  %1433 = vst.msk [vmem:[%s8] sm:$0xff] %vm44, %v1431
  // Predicated region
  $region26: #{char_decoder_forward.1} parent=0 // pred_check
    _
  $region27: #{char_decoder_forward.1} parent=0 // pred_check_branch
    %1435 = sbr.rel (0) target = $region29
  $region28: #{char_decoder_forward.1} parent=0 // pred_region
    _
  $region29: #{char_decoder_forward.1} parent=0 // pred_fallthru
    _
  // Predicated region
  $region30: #{char_decoder_forward.1} parent=0 // pred_check
    _
  $region31: #{char_decoder_forward.1} parent=0 // pred_check_branch
    %1437 = sbr.rel (0) target = $region33
  $region32: #{char_decoder_forward.1} parent=0 // pred_region
    _
  $region33: #{char_decoder_forward.1} parent=0 // pred_fallthru
    _
  // Predicated region
  $region34: #{char_decoder_forward.1} parent=0 // pred_check
    _
  $region35: #{char_decoder_forward.1} parent=0 // pred_check_branch
    %1439 = sbr.rel (0) target = $region37
  $region36: #{char_decoder_forward.1} parent=0 // pred_region
    _
  $region37: #{char_decoder_forward.1} parent=0 // pred_fallthru
    _
  // Predicated region
  $region38: #{char_decoder_forward.1} parent=0 // pred_check
    _
  $region39: #{char_decoder_forward.1} parent=0 // pred_check_branch
    %1441 = sbr.rel (0) target = $region41
  $region40: #{char_decoder_forward.1} parent=0 // pred_region
    _
  $region41: #{char_decoder_forward.1} parent=0 // pred_fallthru
    _
  // Predicated region
  $region42: #{char_decoder_forward.1} parent=0 // pred_check
    _
  $region43: #{char_decoder_forward.1} parent=0 // pred_check_branch
    %1443 = sbr.rel (0) target = $region45
  $region44: #{char_decoder_forward.1} parent=0 // pred_region
    _
  $region45: #{char_decoder_forward.1} parent=0 // pred_fallthru
    _
  // Predicated region
  $region46: #{char_decoder_forward.1} parent=0 // pred_check
    _
  $region47: #{char_decoder_forward.1} parent=0 // pred_check_branch
    %1445 = sbr.rel (0) target = $region49
  $region48: #{char_decoder_forward.1} parent=0 // pred_region
    _
  $region49: #{char_decoder_forward.1} parent=0 // pred_fallthru
    _

</llo_original>
